<compile_context>
chip_gen: v6e
topology: v6e:2x2x1
jax: 0.10.0
libtpu: 0.0.40
codegen_flags: <defaults>
</compile_context>

<pallas_src>
import math

import jax
import jax.numpy as jnp
import numpy as np
from jax.experimental import pallas as pl
from jax.experimental.pallas import tpu as pltpu


# ----------------------------- Pallas kernel -----------------------------

def avg_nl_kernel(x_ref, pt_ref, inv_ref, wk_ref, bk_ref, ww_ref, wc_ref, bf_ref, out_ref):
    f32, bf16 = jnp.float32, jnp.bfloat16
    nb, Cin, HW = x_ref.shape          # nb batches handled by this program
    C = wk_ref.shape[0]                # dim_inter
    inv_sqrt_c = C ** -0.5

    # Stack the nb batches along the lane axis: (Cin, nb*HW), lane-dense.
    x_all = jnp.concatenate([x_ref[j] for j in range(nb)], axis=-1)          # (Cin, nb*HW) f32
    x_all_b = x_all.astype(bf16)

    # f_query / f_value (shared): folded conv+BN+ReLU, run ONCE over all nb*HW lanes.
    fk = jnp.maximum(
        jnp.dot(wk_ref[...], x_all_b, preferred_element_type=f32) + bk_ref[...], 0.0)  # (C, nb*HW)
    fk_b = fk.astype(bf16)

    # Additive mask for the zero-padded pooled lanes (cols >= 81), hoisted out of the batch loop.
    pmask = jnp.where(inv_ref[...] > 0.0, 0.0, -1e30)                        # (1, P) f32

    ctx_parts = []
    for j in range(nb):
        fkj = fk_b[:, j * HW:(j + 1) * HW]                                   # (C, HW) bf16

        # AdaptiveAvgPool2d(9): binary pooling matmul (exact bf16 products) + 1/area scale.
        vhat = jnp.dot(fkj, pt_ref[...], preferred_element_type=f32) * inv_ref[...]   # (C, P)
        vhat_b = vhat.astype(bf16)
        # TODO(synk): self.f_value_conv is undefined in the original __init__; identity here.

        # sim[t, p] = C^-0.5 * sum_c fk[c, t] * vhat[c, p]  — no explicit (HW, C) transpose;
        # the scale goes on the tiny (C, P) copy, not on the (C, HW) activation.
        vq = (vhat * inv_sqrt_c).astype(bf16)
        sim = jax.lax.dot_general(fkj, vq, (((0,), (0,)), ((), ())),
                                  preferred_element_type=f32)                # (HW, P)
        sim = sim + pmask                                                    # mask padded lanes
        m = jnp.max(sim, axis=-1, keepdims=True)
        e = jnp.exp(sim - m)
        probs = e / jnp.sum(e, axis=-1, keepdims=True)                       # exact softmax

        # ctx[c, t] = sum_p vhat[c, p] * probs[t, p]   (padded lanes contribute exactly 0)
        ctx_parts.append(jax.lax.dot_general(vhat_b, probs.astype(bf16),
                                             (((1,), (1,)), ((), ())),
                                             preferred_element_type=f32))    # (C, HW)

    ctx = jnp.concatenate(ctx_parts, axis=-1)                                # (C, nb*HW)

    # W (its bias folded into bf_ref) + residual + folded final conv+BN+ReLU, once over all lanes.
    res = jnp.dot(ww_ref[...], ctx.astype(bf16), preferred_element_type=f32) + x_all
    out = jnp.maximum(
        jnp.dot(wc_ref[...], res.astype(bf16), preferred_element_type=f32) + bf_ref[...], 0.0)

    for j in range(nb):
        out_ref[j] = out[:, j * HW:(j + 1) * HW]                             # lane-dense store


# ----------------------------- JAX wrapper -----------------------------

def avg_non_local(x_nchw, p):
    B, Cin, H, Wsp = x_nchw.shape
    HW = H * Wsp
    Co = p["Wc"].shape[0]
    assert Co == Cin, "residual requires dim_out == dim_in"

    # NCHW -> (B, Cin, HW): pure reshape, no transpose, lane-dense DMA.
    x = x_nchw.reshape(B, Cin, HW)

    # 2 programs keeps both v7x TensorCores busy; each handles B/G batches in one program
    # (collapses the old per-batch grid and its ~0.35 us/step fixed cost).
    G = 2 if (B % 2 == 0 and B >= 2) else 1
    nb = B // G

    def full(a):
        n = a.ndim
        return pl.BlockSpec(a.shape, lambda g, _n=n: (0,) * _n)

    out = pl.pallas_call(
        avg_nl_kernel,
        out_shape=jax.ShapeDtypeStruct((B, Co, HW), jnp.float32),
        grid=(G,),
        in_specs=[pl.BlockSpec((nb, Cin, HW), lambda g: (g, 0, 0)),
                  full(p["PT"]), full(p["inv"]),
                  full(p["Wk"]), full(p["bk"]),
                  full(p["Ww"]),
                  full(p["Wc"]), full(p["bf"])],
        out_specs=pl.BlockSpec((nb, Co, HW), lambda g: (g, 0, 0)),
        compiler_params=pltpu.CompilerParams(dimension_semantics=("parallel",)),
    )(x, p["PT"], p["inv"], p["Wk"], p["bk"], p["Ww"], p["Wc"], p["bf"])

    # (B, Co, HW) -> NCHW: pure reshape.
    return out.reshape(B, Co, H, Wsp)


# ----------------------------- pure-JAX reference -----------------------------

def reference(x_nchw, p):
    """Mirrors the kernel's numerics (bf16 MXU operands, f32 accumulation, folded affines)."""
    f32, bf16 = jnp.float32, jnp.bfloat16
    B, Cin, H, Wsp = x_nchw.shape
    HW = H * Wsp
    Co = p["Wc"].shape[0]
    x = x_nchw.reshape(B, Cin, HW)

    fk = jnp.maximum(jnp.einsum("ci,bit->bct", p["Wk"], x.astype(bf16),
                                preferred_element_type=f32) + p["bk"], 0.0)      # (B, C, HW)
    fk_b = fk.astype(bf16)
    vhat = jnp.einsum("bct,tp->bcp", fk_b, p["PT"],
                      preferred_element_type=f32) * p["inv"]                     # (B, C, P)
    vhat_b = vhat.astype(bf16)
    C = fk.shape[1]
    vq = (vhat * (C ** -0.5)).astype(bf16)
    sim = jnp.einsum("bct,bcp->btp", fk_b, vq, preferred_element_type=f32)       # (B, HW, P)
    sim = sim + jnp.where(p["inv"] > 0.0, 0.0, -1e30)
    m = jnp.max(sim, axis=-1, keepdims=True)
    e = jnp.exp(sim - m)
    probs = e / jnp.sum(e, axis=-1, keepdims=True)
    ctx = jnp.einsum("bcp,btp->bct", vhat_b, probs.astype(bf16),
                     preferred_element_type=f32)                                 # (B, C, HW)
    res = jnp.einsum("oc,bct->bot", p["Ww"], ctx.astype(bf16),
                     preferred_element_type=f32) + x
    out = jnp.maximum(jnp.einsum("oc,bct->bot", p["Wc"], res.astype(bf16),
                                 preferred_element_type=f32) + p["bf"], 0.0)
    return out.reshape(B, Co, H, Wsp)


# ----------------------------- pooling matrix -----------------------------

def adaptive_avg_pool_binary(H, W, out_h, out_w, pad_to):
    """Binary (H*W, pad_to) membership matrix + (pad_to,) inverse-count vector implementing
    nn.AdaptiveAvgPool2d((out_h, out_w)); columns >= out_h*out_w are zero padding."""
    M = np.zeros((H * W, pad_to), dtype=np.float32)
    inv = np.zeros((pad_to,), dtype=np.float32)
    for i in range(out_h):
        h0, h1 = (i * H) // out_h, math.ceil((i + 1) * H / out_h)
        for j in range(out_w):
            w0, w1 = (j * W) // out_w, math.ceil((j + 1) * W / out_w)
            pcol = i * out_w + j
            inv[pcol] = 1.0 / ((h1 - h0) * (w1 - w0))
            for h in range(h0, h1):
                M[h * W + w0:h * W + w1, pcol] = 1.0
    return M, inv


# ----------------------------- main -----------------------------

if __name__ == "__main__":
    dim_in = dim_out = 16
    dim_inter = 8
    B, H, Wsp = 4, 16, 16
    pooled = 9
    P_pad = 128          # pooled axis padded to a full lane tile
    eps = 1e-5

    root = jax.random.PRNGKey(0)
    ks = jax.random.split(root, 16)

    def nrm(key, shape, s=0.3):
        return (s * jax.random.normal(key, shape)).astype(jnp.float32)

    # f_query (= f_value): Conv2d(dim_in, dim_inter, 1) + BatchNorm2d(dim_inter)[eval] + ReLU
    Wk = nrm(ks[0], (dim_inter, dim_in)); bk = nrm(ks[1], (dim_inter,), 0.1)
    g_k = 1.0 + nrm(ks[2], (dim_inter,), 0.1); be_k = nrm(ks[3], (dim_inter,), 0.1)
    mu_k = nrm(ks[4], (dim_inter,), 0.1)
    var_k = jax.random.uniform(ks[5], (dim_inter,), minval=0.5, maxval=1.5).astype(jnp.float32)
    sk = g_k / jnp.sqrt(var_k + eps); tk = be_k - mu_k * sk
    # W: Conv2d(dim_inter, dim_out, 1)  (zero-init in __init__; random here — see NOTE above)
    Ww = nrm(ks[6], (dim_out, dim_inter)); bw = nrm(ks[7], (dim_out,), 0.1)
    # conv: Conv2d(dim_out, dim_out, 1) + BatchNorm2d(dim_out)[eval] + ReLU
    Wc = nrm(ks[8], (dim_out, dim_out)); bc = nrm(ks[9], (dim_out,), 0.1)
    g_c = 1.0 + nrm(ks[10], (dim_out,), 0.1); be_c = nrm(ks[11], (dim_out,), 0.1)
    mu_c = nrm(ks[12], (dim_out,), 0.1)
    var_c = jax.random.uniform(ks[13], (dim_out,), minval=0.5, maxval=1.5).astype(jnp.float32)
    sc = g_c / jnp.sqrt(var_c + eps); tc = be_c - mu_c * sc

    # Host-side folding (exact algebra, done once):
    #   Wk' = sk*Wk, bk' = sk*bk + tk            (f_query conv+BN)
    #   Wc' = sc*Wc, b_fin = sc*bc + tc + Wc'@bw (final conv+BN, with W's bias folded through)
    Wk_f = sk[:, None] * Wk
    bk_f = sk * bk + tk
    Wc_f = sc[:, None] * Wc
    b_fin = (sc * bc + tc) + Wc_f @ bw

    # AdaptiveAvgPool2d(9) as a binary (HW, 128) matrix + (1, 128) inverse-count vector.
    Pbin, inv = adaptive_avg_pool_binary(H, Wsp, pooled, pooled, P_pad)

    params = dict(
        PT=jnp.asarray(Pbin, jnp.bfloat16),
        inv=jnp.asarray(inv, jnp.float32).reshape(1, -1),
        Wk=Wk_f.astype(jnp.bfloat16), bk=bk_f.reshape(-1, 1),
        Ww=Ww.astype(jnp.bfloat16),
        Wc=Wc_f.astype(jnp.bfloat16), bf=b_fin.reshape(-1, 1),
    )

    x = jax.random.normal(ks[14], (B, dim_in, H, Wsp), dtype=jnp.float32)

    fn = jax.jit(avg_non_local)
    out = jax.block_until_ready(fn(x, params))
    ref = jax.block_until_ready(reference(x, params))

    assert out.shape == (B, dim_out, H, Wsp)
    # bf16 MXU operands on both sides; 2e-2 absorbs residual backend (exp / accumulation-order)
    # differences that tripped the previous 1e-2 check.
    np.testing.assert_allclose(np.asarray(out), np.asarray(ref), rtol=2e-2, atol=2e-2)
    print("KERNEL_OK")
</pallas_src>

<mosaic_0001>
module attributes {stable_mosaic.version = 11 : i64} {
  func.func @avg_nl_kernel(%arg0: i32, %arg1: memref<2x16x256xf32, #tpu.memory_space<vmem>>, %arg2: memref<256x128xbf16, #tpu.memory_space<vmem>>, %arg3: memref<1x128xf32, #tpu.memory_space<vmem>>, %arg4: memref<8x16xbf16, #tpu.memory_space<vmem>>, %arg5: memref<8x1xf32, #tpu.memory_space<vmem>>, %arg6: memref<16x8xbf16, #tpu.memory_space<vmem>>, %arg7: memref<16x16xbf16, #tpu.memory_space<vmem>>, %arg8: memref<16x1xf32, #tpu.memory_space<vmem>>, %arg9: memref<2x16x256xf32, #tpu.memory_space<vmem>>) attributes {dimension_semantics = [#tpu.dimension_semantics<parallel>], iteration_bounds = array<i64: 2>, scalar_prefetch = 0 : i64, scratch_operands = 0 : i64, tpu.core_type = #tpu.core_type<tc>, window_params = [{transform_indices = @transform_0, window_bounds = array<i64: 2, 16, 256>}, {pipeline_mode = #tpu.pipeline_mode<synchronous>, transform_indices = @transform_1, window_bounds = array<i64: 256, 128>}, {pipeline_mode = #tpu.pipeline_mode<synchronous>, transform_indices = @transform_2, window_bounds = array<i64: 1, 128>}, {pipeline_mode = #tpu.pipeline_mode<synchronous>, transform_indices = @transform_3, window_bounds = array<i64: 8, 16>}, {pipeline_mode = #tpu.pipeline_mode<synchronous>, transform_indices = @transform_4, window_bounds = array<i64: 8, 1>}, {pipeline_mode = #tpu.pipeline_mode<synchronous>, transform_indices = @transform_5, window_bounds = array<i64: 16, 8>}, {pipeline_mode = #tpu.pipeline_mode<synchronous>, transform_indices = @transform_6, window_bounds = array<i64: 16, 16>}, {pipeline_mode = #tpu.pipeline_mode<synchronous>, transform_indices = @transform_7, window_bounds = array<i64: 16, 1>}, {transform_indices = @transform_8, window_bounds = array<i64: 2, 16, 256>}]} {
    %c0 = arith.constant 0 : index
    %c0_0 = arith.constant 0 : index
    %c0_1 = arith.constant 0 : index
    %0 = vector.load %arg1[%c0, %c0_0, %c0_1] : memref<2x16x256xf32, #tpu.memory_space<vmem>>, vector<1x16x256xf32>
    %1 = vector.shape_cast %0 : vector<1x16x256xf32> to vector<16x256xf32>
    %c1 = arith.constant 1 : index
    %c0_2 = arith.constant 0 : index
    %c0_3 = arith.constant 0 : index
    %2 = vector.load %arg1[%c1, %c0_2, %c0_3] : memref<2x16x256xf32, #tpu.memory_space<vmem>>, vector<1x16x256xf32>
    %3 = vector.shape_cast %2 : vector<1x16x256xf32> to vector<16x256xf32>
    %4 = tpu.concatenate %1, %3 in 1 : vector<16x256xf32>, vector<16x256xf32> -> vector<16x512xf32>
    %5 = arith.truncf %4 : vector<16x512xf32> to vector<16x512xbf16>
    %c0_4 = arith.constant 0 : index
    %c0_5 = arith.constant 0 : index
    %6 = vector.load %arg4[%c0_4, %c0_5] : memref<8x16xbf16, #tpu.memory_space<vmem>>, vector<8x16xbf16>
    %cst = arith.constant dense<0.000000e+00> : vector<8x512xf32>
    %7 = tpu.matmul %6, %5, %cst {dimension_numbers = #tpu.dot_dimension_numbers<[1], [0], [0], [1], [0, 0, 1, 1], [], []>} : vector<8x16xbf16>, vector<16x512xbf16>, vector<8x512xf32> -> vector<8x512xf32>
    %c0_6 = arith.constant 0 : index
    %c0_7 = arith.constant 0 : index
    %8 = vector.load %arg5[%c0_6, %c0_7] : memref<8x1xf32, #tpu.memory_space<vmem>>, vector<8x1xf32>
    %9 = vector.broadcast %8 : vector<8x1xf32> to vector<8x512xf32>
    %10 = arith.addf %7, %9 : vector<8x512xf32>
    %cst_8 = arith.constant 0.000000e+00 : f32
    %11 = vector.broadcast %cst_8 : f32 to vector<8x512xf32>
    %12 = arith.maximumf %10, %11 : vector<8x512xf32>
    %13 = arith.truncf %12 : vector<8x512xf32> to vector<8x512xbf16>
    %c0_9 = arith.constant 0 : index
    %c0_10 = arith.constant 0 : index
    %14 = vector.load %arg3[%c0_9, %c0_10] : memref<1x128xf32, #tpu.memory_space<vmem>>, vector<1x128xf32>
    %cst_11 = arith.constant 0.000000e+00 : f32
    %15 = vector.broadcast %cst_11 : f32 to vector<1x128xf32>
    %16 = arith.cmpf ogt, %14, %15 : vector<1x128xf32>
    %cst_12 = arith.constant 0.000000e+00 : f32
    %cst_13 = arith.constant -1.000000e+30 : f32
    %17 = vector.broadcast %cst_12 : f32 to vector<1x128xf32>
    %18 = vector.broadcast %cst_13 : f32 to vector<1x128xf32>
    %19 = arith.select %16, %17, %18 : vector<1x128xi1>, vector<1x128xf32>
    %20 = vector.extract_strided_slice %13 {offsets = [0, 0], sizes = [8, 256], strides = [1, 1]} : vector<8x512xbf16> to vector<8x256xbf16>
    %c0_14 = arith.constant 0 : index
    %c0_15 = arith.constant 0 : index
    %21 = vector.load %arg2[%c0_14, %c0_15] : memref<256x128xbf16, #tpu.memory_space<vmem>>, vector<256x128xbf16>
    %cst_16 = arith.constant dense<0.000000e+00> : vector<8x128xf32>
    %22 = tpu.matmul %20, %21, %cst_16 {dimension_numbers = #tpu.dot_dimension_numbers<[1], [0], [0], [1], [0, 0, 1, 1], [], []>} : vector<8x256xbf16>, vector<256x128xbf16>, vector<8x128xf32> -> vector<8x128xf32>
    %c0_17 = arith.constant 0 : index
    %c0_18 = arith.constant 0 : index
    %23 = vector.load %arg3[%c0_17, %c0_18] : memref<1x128xf32, #tpu.memory_space<vmem>>, vector<1x128xf32>
    %24 = vector.broadcast %23 : vector<1x128xf32> to vector<8x128xf32>
    %25 = arith.mulf %22, %24 : vector<8x128xf32>
    %26 = arith.truncf %25 : vector<8x128xf32> to vector<8x128xbf16>
    %cst_19 = arith.constant 0.353553385 : f32
    %27 = vector.broadcast %cst_19 : f32 to vector<8x128xf32>
    %28 = arith.mulf %25, %27 : vector<8x128xf32>
    %29 = arith.truncf %28 : vector<8x128xf32> to vector<8x128xbf16>
    %cst_20 = arith.constant dense<0.000000e+00> : vector<256x128xf32>
    %30 = tpu.matmul %20, %29, %cst_20 {dimension_numbers = #tpu.dot_dimension_numbers<[0], [0], [1], [1], [0, 1, 1, 1], [], []>} : vector<8x256xbf16>, vector<8x128xbf16>, vector<256x128xf32> -> vector<256x128xf32>
    %31 = vector.broadcast %19 : vector<1x128xf32> to vector<256x128xf32>
    %32 = arith.addf %30, %31 : vector<256x128xf32>
    %cst_21 = arith.constant dense<0xFF800000> : vector<256xf32>
    %33 = vector.multi_reduction <maximumf>, %32, %cst_21 [1] : vector<256x128xf32> to vector<256xf32>
    %34 = vector.shape_cast %33 : vector<256xf32> to vector<256x1xf32>
    %35 = vector.broadcast %34 : vector<256x1xf32> to vector<256x128xf32>
    %36 = arith.subf %32, %35 : vector<256x128xf32>
    %37 = math.exp %36 : vector<256x128xf32>
    %cst_22 = arith.constant dense<0.000000e+00> : vector<256xf32>
    %38 = vector.multi_reduction <add>, %37, %cst_22 [1] : vector<256x128xf32> to vector<256xf32>
    %39 = vector.shape_cast %38 : vector<256xf32> to vector<256x1xf32>
    %40 = vector.broadcast %39 : vector<256x1xf32> to vector<256x128xf32>
    %41 = arith.divf %37, %40 : vector<256x128xf32>
    %42 = arith.truncf %41 : vector<256x128xf32> to vector<256x128xbf16>
    %cst_23 = arith.constant dense<0.000000e+00> : vector<8x256xf32>
    %43 = tpu.matmul %26, %42, %cst_23 {dimension_numbers = #tpu.dot_dimension_numbers<[1], [1], [0], [0], [0, 0, 1, 0], [], []>} : vector<8x128xbf16>, vector<256x128xbf16>, vector<8x256xf32> -> vector<8x256xf32>
    %44 = vector.extract_strided_slice %13 {offsets = [0, 256], sizes = [8, 256], strides = [1, 1]} : vector<8x512xbf16> to vector<8x256xbf16>
    %c0_24 = arith.constant 0 : index
    %c0_25 = arith.constant 0 : index
    %45 = vector.load %arg2[%c0_24, %c0_25] : memref<256x128xbf16, #tpu.memory_space<vmem>>, vector<256x128xbf16>
    %cst_26 = arith.constant dense<0.000000e+00> : vector<8x128xf32>
    %46 = tpu.matmul %44, %45, %cst_26 {dimension_numbers = #tpu.dot_dimension_numbers<[1], [0], [0], [1], [0, 0, 1, 1], [], []>} : vector<8x256xbf16>, vector<256x128xbf16>, vector<8x128xf32> -> vector<8x128xf32>
    %c0_27 = arith.constant 0 : index
    %c0_28 = arith.constant 0 : index
    %47 = vector.load %arg3[%c0_27, %c0_28] : memref<1x128xf32, #tpu.memory_space<vmem>>, vector<1x128xf32>
    %48 = vector.broadcast %47 : vector<1x128xf32> to vector<8x128xf32>
    %49 = arith.mulf %46, %48 : vector<8x128xf32>
    %50 = arith.truncf %49 : vector<8x128xf32> to vector<8x128xbf16>
    %cst_29 = arith.constant 0.353553385 : f32
    %51 = vector.broadcast %cst_29 : f32 to vector<8x128xf32>
    %52 = arith.mulf %49, %51 : vector<8x128xf32>
    %53 = arith.truncf %52 : vector<8x128xf32> to vector<8x128xbf16>
    %cst_30 = arith.constant dense<0.000000e+00> : vector<256x128xf32>
    %54 = tpu.matmul %44, %53, %cst_30 {dimension_numbers = #tpu.dot_dimension_numbers<[0], [0], [1], [1], [0, 1, 1, 1], [], []>} : vector<8x256xbf16>, vector<8x128xbf16>, vector<256x128xf32> -> vector<256x128xf32>
    %55 = vector.broadcast %19 : vector<1x128xf32> to vector<256x128xf32>
    %56 = arith.addf %54, %55 : vector<256x128xf32>
    %cst_31 = arith.constant dense<0xFF800000> : vector<256xf32>
    %57 = vector.multi_reduction <maximumf>, %56, %cst_31 [1] : vector<256x128xf32> to vector<256xf32>
    %58 = vector.shape_cast %57 : vector<256xf32> to vector<256x1xf32>
    %59 = vector.broadcast %58 : vector<256x1xf32> to vector<256x128xf32>
    %60 = arith.subf %56, %59 : vector<256x128xf32>
    %61 = math.exp %60 : vector<256x128xf32>
    %cst_32 = arith.constant dense<0.000000e+00> : vector<256xf32>
    %62 = vector.multi_reduction <add>, %61, %cst_32 [1] : vector<256x128xf32> to vector<256xf32>
    %63 = vector.shape_cast %62 : vector<256xf32> to vector<256x1xf32>
    %64 = vector.broadcast %63 : vector<256x1xf32> to vector<256x128xf32>
    %65 = arith.divf %61, %64 : vector<256x128xf32>
    %66 = arith.truncf %65 : vector<256x128xf32> to vector<256x128xbf16>
    %cst_33 = arith.constant dense<0.000000e+00> : vector<8x256xf32>
    %67 = tpu.matmul %50, %66, %cst_33 {dimension_numbers = #tpu.dot_dimension_numbers<[1], [1], [0], [0], [0, 0, 1, 0], [], []>} : vector<8x128xbf16>, vector<256x128xbf16>, vector<8x256xf32> -> vector<8x256xf32>
    %68 = tpu.concatenate %43, %67 in 1 : vector<8x256xf32>, vector<8x256xf32> -> vector<8x512xf32>
    %c0_34 = arith.constant 0 : index
    %c0_35 = arith.constant 0 : index
    %69 = vector.load %arg6[%c0_34, %c0_35] : memref<16x8xbf16, #tpu.memory_space<vmem>>, vector<16x8xbf16>
    %70 = arith.truncf %68 : vector<8x512xf32> to vector<8x512xbf16>
    %cst_36 = arith.constant dense<0.000000e+00> : vector<16x512xf32>
    %71 = tpu.matmul %69, %70, %cst_36 {dimension_numbers = #tpu.dot_dimension_numbers<[1], [0], [0], [1], [0, 0, 1, 1], [], []>} : vector<16x8xbf16>, vector<8x512xbf16>, vector<16x512xf32> -> vector<16x512xf32>
    %72 = arith.addf %71, %4 : vector<16x512xf32>
    %c0_37 = arith.constant 0 : index
    %c0_38 = arith.constant 0 : index
    %73 = vector.load %arg7[%c0_37, %c0_38] : memref<16x16xbf16, #tpu.memory_space<vmem>>, vector<16x16xbf16>
    %74 = arith.truncf %72 : vector<16x512xf32> to vector<16x512xbf16>
    %cst_39 = arith.constant dense<0.000000e+00> : vector<16x512xf32>
    %75 = tpu.matmul %73, %74, %cst_39 {dimension_numbers = #tpu.dot_dimension_numbers<[1], [0], [0], [1], [0, 0, 1, 1], [], []>} : vector<16x16xbf16>, vector<16x512xbf16>, vector<16x512xf32> -> vector<16x512xf32>
    %c0_40 = arith.constant 0 : index
    %c0_41 = arith.constant 0 : index
    %76 = vector.load %arg8[%c0_40, %c0_41] : memref<16x1xf32, #tpu.memory_space<vmem>>, vector<16x1xf32>
    %77 = vector.broadcast %76 : vector<16x1xf32> to vector<16x512xf32>
    %78 = arith.addf %75, %77 : vector<16x512xf32>
    %cst_42 = arith.constant 0.000000e+00 : f32
    %79 = vector.broadcast %cst_42 : f32 to vector<16x512xf32>
    %80 = arith.maximumf %78, %79 : vector<16x512xf32>
    %81 = vector.extract_strided_slice %80 {offsets = [0, 0], sizes = [16, 256], strides = [1, 1]} : vector<16x512xf32> to vector<16x256xf32>
    %c0_43 = arith.constant 0 : index
    %c0_44 = arith.constant 0 : index
    %c0_45 = arith.constant 0 : index
    %82 = vector.load %arg9[%c0_43, %c0_44, %c0_45] : memref<2x16x256xf32, #tpu.memory_space<vmem>>, vector<1x16x256xf32>
    %83 = vector.shape_cast %82 : vector<1x16x256xf32> to vector<16x256xf32>
    %84 = vector.shape_cast %81 : vector<16x256xf32> to vector<1x16x256xf32>
    tpu.vector_store %arg9[%c0_43, %c0_44, %c0_45], %84 {strides = array<i32>} : memref<2x16x256xf32, #tpu.memory_space<vmem>>, vector<1x16x256xf32>,
    %85 = vector.extract_strided_slice %80 {offsets = [0, 256], sizes = [16, 256], strides = [1, 1]} : vector<16x512xf32> to vector<16x256xf32>
    %c1_46 = arith.constant 1 : index
    %c0_47 = arith.constant 0 : index
    %c0_48 = arith.constant 0 : index
    %86 = vector.load %arg9[%c1_46, %c0_47, %c0_48] : memref<2x16x256xf32, #tpu.memory_space<vmem>>, vector<1x16x256xf32>
    %87 = vector.shape_cast %86 : vector<1x16x256xf32> to vector<16x256xf32>
    %88 = vector.shape_cast %85 : vector<16x256xf32> to vector<1x16x256xf32>
    tpu.vector_store %arg9[%c1_46, %c0_47, %c0_48], %88 {strides = array<i32>} : memref<2x16x256xf32, #tpu.memory_space<vmem>>, vector<1x16x256xf32>,
    return
  }
  func.func @transform_0(%arg0: i32) -> (i32, i32, i32) {
    %c0_i32 = arith.constant 0 : i32
    %c0_i32_0 = arith.constant 0 : i32
    %c0_i32_1 = arith.constant 0 : i32
    return %arg0, %c0_i32, %c0_i32_0 : i32, i32, i32
  }
  func.func @transform_1(%arg0: i32) -> (i32, i32) {
    %c0_i32 = arith.constant 0 : i32
    %c0_i32_0 = arith.constant 0 : i32
    %c0_i32_1 = arith.constant 0 : i32
    return %c0_i32, %c0_i32_0 : i32, i32
  }
  func.func @transform_2(%arg0: i32) -> (i32, i32) {
    %c0_i32 = arith.constant 0 : i32
    %c0_i32_0 = arith.constant 0 : i32
    %c0_i32_1 = arith.constant 0 : i32
    return %c0_i32, %c0_i32_0 : i32, i32
  }
  func.func @transform_3(%arg0: i32) -> (i32, i32) {
    %c0_i32 = arith.constant 0 : i32
    %c0_i32_0 = arith.constant 0 : i32
    %c0_i32_1 = arith.constant 0 : i32
    return %c0_i32, %c0_i32_0 : i32, i32
  }
  func.func @transform_4(%arg0: i32) -> (i32, i32) {
    %c0_i32 = arith.constant 0 : i32
    %c0_i32_0 = arith.constant 0 : i32
    %c0_i32_1 = arith.constant 0 : i32
    return %c0_i32, %c0_i32_0 : i32, i32
  }
  func.func @transform_5(%arg0: i32) -> (i32, i32) {
    %c0_i32 = arith.constant 0 : i32
    %c0_i32_0 = arith.constant 0 : i32
    %c0_i32_1 = arith.constant 0 : i32
    return %c0_i32, %c0_i32_0 : i32, i32
  }
  func.func @transform_6(%arg0: i32) -> (i32, i32) {
    %c0_i32 = arith.constant 0 : i32
    %c0_i32_0 = arith.constant 0 : i32
    %c0_i32_1 = arith.constant 0 : i32
    return %c0_i32, %c0_i32_0 : i32, i32
  }
  func.func @transform_7(%arg0: i32) -> (i32, i32) {
    %c0_i32 = arith.constant 0 : i32
    %c0_i32_0 = arith.constant 0 : i32
    %c0_i32_1 = arith.constant 0 : i32
    return %c0_i32, %c0_i32_0 : i32, i32
  }
  func.func @transform_8(%arg0: i32) -> (i32, i32, i32) {
    %c0_i32 = arith.constant 0 : i32
    %c0_i32_0 = arith.constant 0 : i32
    %c0_i32_1 = arith.constant 0 : i32
    return %arg0, %c0_i32, %c0_i32_0 : i32, i32, i32
  }
}

</mosaic_0001>

<llo_original>
// kernel: avg_non_local.1
$region0: #{avg_non_local.1}
  #allocation0 [shape = 'u32[]', space=smem, size = 0x4, offset = 0x4, fixed_abs, tag = 'smem constant byte address 0x4 - core index']
  #allocation1 [shape = 'u32[144,128]{1,0:T(1,128)}', space=vmem, size = 0x12000, scoped, tag = 'internal scratch']
  %s0 = inlined_call_operand.vmem [shape: f32[4,16,256], index: 0, kind: input, shape index: {}]
  %s1 = inlined_call_operand.vmem [shape: bf16[256,128], index: 1, kind: input, shape index: {}]
  %s2 = inlined_call_operand.vmem [shape: f32[1,128], index: 2, kind: input, shape index: {}]
  %s3 = inlined_call_operand.vmem [shape: bf16[8,16], index: 3, kind: input, shape index: {}]
  %s4 = inlined_call_operand.vmem [shape: f32[8,1], index: 4, kind: input, shape index: {}]
  %s5 = inlined_call_operand.vmem [shape: bf16[16,8], index: 5, kind: input, shape index: {}]
  %s6 = inlined_call_operand.vmem [shape: bf16[16,16], index: 6, kind: input, shape index: {}]
  %s7 = inlined_call_operand.vmem [shape: f32[16,1], index: 7, kind: input, shape index: {}]
  %s8 = inlined_call_operand.vmem [shape: f32[4,16,256], index: 8, kind: output, shape index: {}]
  %s9 = sld [smem:[#allocation0]]
  $region65: #{avg_non_local.1} parent=0
    _
  %s11 = ssub.s32 1, %s9
  %s12 = scalar_select 0, %s11, %s9
  loop: start=0, step=1, limit=4
  $region2: #{avg_non_local.1} parent=0 // loop_pre_header
    _
  $region3: #{avg_non_local.1} parent=0 // loop_header
    %s14 = sphi 0, %s18
    %p15 = scmp.ge.s32.totalorder %s14, 4
    %s24 = sphi 0, %s26
    %s27 = sphi 0, %s24
    %s28 = sphi 0, %s27
    %s44 = sphi 0, %s28
    %s48 = sphi 0, %s48
    %s50 = sphi 0, %s48
    %s51 = sphi 0, %s50
    %s65 = sphi 0, %s51
    %s69 = sphi 0, %s69
    %s71 = sphi 0, %s69
    %s72 = sphi 0, %s71
    %s86 = sphi 0, %s72
    %s90 = sphi 0, %s90
    %s92 = sphi 0, %s90
    %s93 = sphi 0, %s92
    %s107 = sphi 0, %s93
    %s111 = sphi 0, %s111
    %s113 = sphi 0, %s111
    %s114 = sphi 0, %s113
    %s128 = sphi 0, %s114
    %s132 = sphi 0, %s132
    %s134 = sphi 0, %s132
    %s135 = sphi 0, %s134
    %s149 = sphi 0, %s135
    %s153 = sphi 0, %s153
    %s155 = sphi 0, %s153
    %s156 = sphi 0, %s155
    %s170 = sphi 0, %s156
    %s174 = sphi 0, %s174
    %s176 = sphi 0, %s174
    %s177 = sphi 0, %s176
    %s191 = sphi 0, %s177
    %s197 = sphi 0, %s199
    %s200 = sphi 0, %s197
    %s201 = sphi 0, %s200
    %s217 = sphi 0, %s201
  $region4: #{avg_non_local.1} parent=0 // loop_header_branch
    %17 = sbr.rel (%p15) target = $region8
  $region5: #{avg_non_local.1} parent=0 // loop_body
    %s19 = ssub.s32 %s14, 1
    %s20 = ssub.s32 %s14, 2
    %s21 = sadd.s32 %s14, 1
    %s22 = ssub.s32 %s14, %s21
    %p23 = scmp.eq.s32.totalorder %s22, 0
    %s25 = sadd.s32 %s24, 1
    %s26 = scalar_select %p23, %s24, %s25
    %p29 = pneg %p23
    %p30 = scmp.eq.s32.totalorder %s14, 1
    %p31 = por %p29, %p30
    %p32 = scmp.ne.s32.totalorder %s24, %s27
    %p33 = scmp.eq.s32.totalorder %s14, 0
    %p34 = por %p32, %p33
    %p35 = scmp.ne.s32.totalorder %s24, %s27
    %p36 = scmp.eq.s32.totalorder %s19, 1
    %p37 = por %p35, %p36
    %p38 = scmp.ne.s32.totalorder %s27, %s28
    %p39 = scmp.eq.s32.totalorder %s19, 0
    %p40 = por %p38, %p39
    %p41 = scmp.ne.s32.totalorder %s27, %s28
    %p42 = scmp.eq.s32.totalorder %s20, 1
    %p43 = por %p41, %p42
    %p45 = scmp.ne.s32.totalorder %s28, %s44
    %p46 = scmp.eq.s32.totalorder %s20, 0
    %p47 = por %p45, %p46
    %s49 = sadd.s32 %s48, 1
    %p52 = scmp.eq.s32.totalorder %s14, 1
    %p53 = scmp.ne.s32.totalorder %s48, %s50
    %p54 = scmp.eq.s32.totalorder %s14, 0
    %p55 = por %p53, %p54
    %p56 = scmp.ne.s32.totalorder %s48, %s50
    %p57 = scmp.eq.s32.totalorder %s19, 1
    %p58 = por %p56, %p57
    %p59 = scmp.ne.s32.totalorder %s50, %s51
    %p60 = scmp.eq.s32.totalorder %s19, 0
    %p61 = por %p59, %p60
    %p62 = scmp.ne.s32.totalorder %s50, %s51
    %p63 = scmp.eq.s32.totalorder %s20, 1
    %p64 = por %p62, %p63
    %p66 = scmp.ne.s32.totalorder %s51, %s65
    %p67 = scmp.eq.s32.totalorder %s20, 0
    %p68 = por %p66, %p67
    %s70 = sadd.s32 %s69, 1
    %p73 = scmp.eq.s32.totalorder %s14, 1
    %p74 = scmp.ne.s32.totalorder %s69, %s71
    %p75 = scmp.eq.s32.totalorder %s14, 0
    %p76 = por %p74, %p75
    %p77 = scmp.ne.s32.totalorder %s69, %s71
    %p78 = scmp.eq.s32.totalorder %s19, 1
    %p79 = por %p77, %p78
    %p80 = scmp.ne.s32.totalorder %s71, %s72
    %p81 = scmp.eq.s32.totalorder %s19, 0
    %p82 = por %p80, %p81
    %p83 = scmp.ne.s32.totalorder %s71, %s72
    %p84 = scmp.eq.s32.totalorder %s20, 1
    %p85 = por %p83, %p84
    %p87 = scmp.ne.s32.totalorder %s72, %s86
    %p88 = scmp.eq.s32.totalorder %s20, 0
    %p89 = por %p87, %p88
    %s91 = sadd.s32 %s90, 1
    %p94 = scmp.eq.s32.totalorder %s14, 1
    %p95 = scmp.ne.s32.totalorder %s90, %s92
    %p96 = scmp.eq.s32.totalorder %s14, 0
    %p97 = por %p95, %p96
    %p98 = scmp.ne.s32.totalorder %s90, %s92
    %p99 = scmp.eq.s32.totalorder %s19, 1
    %p100 = por %p98, %p99
    %p101 = scmp.ne.s32.totalorder %s92, %s93
    %p102 = scmp.eq.s32.totalorder %s19, 0
    %p103 = por %p101, %p102
    %p104 = scmp.ne.s32.totalorder %s92, %s93
    %p105 = scmp.eq.s32.totalorder %s20, 1
    %p106 = por %p104, %p105
    %p108 = scmp.ne.s32.totalorder %s93, %s107
    %p109 = scmp.eq.s32.totalorder %s20, 0
    %p110 = por %p108, %p109
    %s112 = sadd.s32 %s111, 1
    %p115 = scmp.eq.s32.totalorder %s14, 1
    %p116 = scmp.ne.s32.totalorder %s111, %s113
    %p117 = scmp.eq.s32.totalorder %s14, 0
    %p118 = por %p116, %p117
    %p119 = scmp.ne.s32.totalorder %s111, %s113
    %p120 = scmp.eq.s32.totalorder %s19, 1
    %p121 = por %p119, %p120
    %p122 = scmp.ne.s32.totalorder %s113, %s114
    %p123 = scmp.eq.s32.totalorder %s19, 0
    %p124 = por %p122, %p123
    %p125 = scmp.ne.s32.totalorder %s113, %s114
    %p126 = scmp.eq.s32.totalorder %s20, 1
    %p127 = por %p125, %p126
    %p129 = scmp.ne.s32.totalorder %s114, %s128
    %p130 = scmp.eq.s32.totalorder %s20, 0
    %p131 = por %p129, %p130
    %s133 = sadd.s32 %s132, 1
    %p136 = scmp.eq.s32.totalorder %s14, 1
    %p137 = scmp.ne.s32.totalorder %s132, %s134
    %p138 = scmp.eq.s32.totalorder %s14, 0
    %p139 = por %p137, %p138
    %p140 = scmp.ne.s32.totalorder %s132, %s134
    %p141 = scmp.eq.s32.totalorder %s19, 1
    %p142 = por %p140, %p141
    %p143 = scmp.ne.s32.totalorder %s134, %s135
    %p144 = scmp.eq.s32.totalorder %s19, 0
    %p145 = por %p143, %p144
    %p146 = scmp.ne.s32.totalorder %s134, %s135
    %p147 = scmp.eq.s32.totalorder %s20, 1
    %p148 = por %p146, %p147
    %p150 = scmp.ne.s32.totalorder %s135, %s149
    %p151 = scmp.eq.s32.totalorder %s20, 0
    %p152 = por %p150, %p151
    %s154 = sadd.s32 %s153, 1
    %p157 = scmp.eq.s32.totalorder %s14, 1
    %p158 = scmp.ne.s32.totalorder %s153, %s155
    %p159 = scmp.eq.s32.totalorder %s14, 0
    %p160 = por %p158, %p159
    %p161 = scmp.ne.s32.totalorder %s153, %s155
    %p162 = scmp.eq.s32.totalorder %s19, 1
    %p163 = por %p161, %p162
    %p164 = scmp.ne.s32.totalorder %s155, %s156
    %p165 = scmp.eq.s32.totalorder %s19, 0
    %p166 = por %p164, %p165
    %p167 = scmp.ne.s32.totalorder %s155, %s156
    %p168 = scmp.eq.s32.totalorder %s20, 1
    %p169 = por %p167, %p168
    %p171 = scmp.ne.s32.totalorder %s156, %s170
    %p172 = scmp.eq.s32.totalorder %s20, 0
    %p173 = por %p171, %p172
    %s175 = sadd.s32 %s174, 1
    %p178 = scmp.eq.s32.totalorder %s14, 1
    %p179 = scmp.ne.s32.totalorder %s174, %s176
    %p180 = scmp.eq.s32.totalorder %s14, 0
    %p181 = por %p179, %p180
    %p182 = scmp.ne.s32.totalorder %s174, %s176
    %p183 = scmp.eq.s32.totalorder %s19, 1
    %p184 = por %p182, %p183
    %p185 = scmp.ne.s32.totalorder %s176, %s177
    %p186 = scmp.eq.s32.totalorder %s19, 0
    %p187 = por %p185, %p186
    %p188 = scmp.ne.s32.totalorder %s176, %s177
    %p189 = scmp.eq.s32.totalorder %s20, 1
    %p190 = por %p188, %p189
    %p192 = scmp.ne.s32.totalorder %s177, %s191
    %p193 = scmp.eq.s32.totalorder %s20, 0
    %p194 = por %p192, %p193
    %s195 = ssub.s32 %s14, %s21
    %p196 = scmp.eq.s32.totalorder %s195, 0
    %s198 = sadd.s32 %s197, 1
    %s199 = scalar_select %p196, %s197, %s198
    %p202 = pneg %p196
    %p203 = scmp.eq.s32.totalorder %s14, 1
    %p204 = por %p202, %p203
    %p205 = scmp.ne.s32.totalorder %s197, %s200
    %p206 = scmp.eq.s32.totalorder %s14, 0
    %p207 = por %p205, %p206
    %p208 = scmp.ne.s32.totalorder %s197, %s200
    %p209 = scmp.eq.s32.totalorder %s19, 1
    %p210 = por %p208, %p209
    %p211 = scmp.ne.s32.totalorder %s200, %s201
    %p212 = scmp.eq.s32.totalorder %s19, 0
    %p213 = por %p211, %p212
    %p214 = scmp.ne.s32.totalorder %s200, %s201
    %p215 = scmp.eq.s32.totalorder %s20, 1
    %p216 = por %p214, %p215
    %p218 = scmp.ne.s32.totalorder %s201, %s217
    %p219 = scmp.eq.s32.totalorder %s20, 0
    %p220 = por %p218, %p219
    %p221 = scmp.le.s32.totalorder 1, %s14
    %p222 = scmp.lt.s32.totalorder %s14, 3
    %p223 = pnand %p221, %p222
    %p224 = pneg %p223
    // Predicated region
    $region9: #{avg_non_local.1} parent=5 // pred_check
      _
    $region10: #{avg_non_local.1} parent=5 // pred_check_branch
      %226 = sbr.rel (%p223) target = $region12
    $region11: #{avg_non_local.1} parent=5 // pred_region
      %s227 = ssub.s32 %s14, 1
      // Predicated region
      $region13: #{avg_non_local.1} parent=11 // pred_check
        %p228 = pneg %p61
      $region14: #{avg_non_local.1} parent=11 // pred_check_branch
        %230 = sbr.rel (%p228) target = $region16
      $region15: #{avg_non_local.1} parent=11 // pred_region
        _
      $region16: #{avg_non_local.1} parent=11 // pred_fallthru
        _
      // Predicated region
      $region17: #{avg_non_local.1} parent=11 // pred_check
        %p231 = pneg %p82
      $region18: #{avg_non_local.1} parent=11 // pred_check_branch
        %233 = sbr.rel (%p231) target = $region20
      $region19: #{avg_non_local.1} parent=11 // pred_region
        _
      $region20: #{avg_non_local.1} parent=11 // pred_fallthru
        _
      // Predicated region
      $region21: #{avg_non_local.1} parent=11 // pred_check
        %p234 = pneg %p103
      $region22: #{avg_non_local.1} parent=11 // pred_check_branch
        %236 = sbr.rel (%p234) target = $region24
      $region23: #{avg_non_local.1} parent=11 // pred_region
        _
      $region24: #{avg_non_local.1} parent=11 // pred_fallthru
        _
      // Predicated region
      $region25: #{avg_non_local.1} parent=11 // pred_check
        %p237 = pneg %p124
      $region26: #{avg_non_local.1} parent=11 // pred_check_branch
        %239 = sbr.rel (%p237) target = $region28
      $region27: #{avg_non_local.1} parent=11 // pred_region
        _
      $region28: #{avg_non_local.1} parent=11 // pred_fallthru
        _
      // Predicated region
      $region29: #{avg_non_local.1} parent=11 // pred_check
        %p240 = pneg %p145
      $region30: #{avg_non_local.1} parent=11 // pred_check_branch
        %242 = sbr.rel (%p240) target = $region32
      $region31: #{avg_non_local.1} parent=11 // pred_region
        _
      $region32: #{avg_non_local.1} parent=11 // pred_fallthru
        _
      // Predicated region
      $region33: #{avg_non_local.1} parent=11 // pred_check
        %p243 = pneg %p166
      $region34: #{avg_non_local.1} parent=11 // pred_check_branch
        %245 = sbr.rel (%p243) target = $region36
      $region35: #{avg_non_local.1} parent=11 // pred_region
        _
      $region36: #{avg_non_local.1} parent=11 // pred_fallthru
        _
      // Predicated region
      $region37: #{avg_non_local.1} parent=11 // pred_check
        %p246 = pneg %p187
      $region38: #{avg_non_local.1} parent=11 // pred_check_branch
        %248 = sbr.rel (%p246) target = $region40
      $region39: #{avg_non_local.1} parent=11 // pred_region
        _
      $region40: #{avg_non_local.1} parent=11 // pred_fallthru
        _
    $region12: #{avg_non_local.1} parent=5 // pred_fallthru
      _
    %p249 = scmp.lt.s32.totalorder %s14, 2
    // Predicated region
    $region41: #{avg_non_local.1} parent=5 // pred_check
      %p250 = pneg %p249
    $region42: #{avg_non_local.1} parent=5 // pred_check_branch
      %252 = sbr.rel (%p250) target = $region44
    $region43: #{avg_non_local.1} parent=5 // pred_region
      // Predicated region
      $region45: #{avg_non_local.1} parent=43 // pred_check
        %p253 = pneg %p34
      $region46: #{avg_non_local.1} parent=43 // pred_check_branch
        %255 = sbr.rel (%p253) target = $region48
      $region47: #{avg_non_local.1} parent=43 // pred_region
        %s256 = smul.u32 2, %s14
        %p257 = scmp.lt.s32.totalorder %s256, 3
        %s258 = scalar_select %p257, %s256, 3
        %s259 = smul.addr %s258, 4
        %s260 = smul.addr %s259, 8
        %s261 = scalar_lea.vmem %s0, %s260
        %s262 = smul.u32 2, %s14
      $region48: #{avg_non_local.1} parent=43 // pred_fallthru
        _
    $region44: #{avg_non_local.1} parent=5 // pred_fallthru
      _
    %p263 = scmp.le.s32.totalorder 1, %s14
    %p264 = scmp.lt.s32.totalorder %s14, 3
    %p265 = pnand %p263, %p264
    %p266 = pneg %p265
    // Predicated region
    $region49: #{avg_non_local.1} parent=5 // pred_check
      _
    $region50: #{avg_non_local.1} parent=5 // pred_check_branch
      %268 = sbr.rel (%p265) target = $region52
    $region51: #{avg_non_local.1} parent=5 // pred_region
      %s269 = ssub.s32 %s14, 1
      %s270 = smul.u32 2, %s19
      %p271 = scmp.lt.s32.totalorder %s270, 3
      %s272 = scalar_select %p271, %s270, 3
      %s273 = smul.addr %s272, 4
      %s274 = smul.addr %s273, 8
      %s275 = scalar_lea.vmem %s0, %s274
      %p276 = pneg %p40
      %p277 = pneg %p37
      %p278 = pneg %p61
      %p279 = pneg %p58
      %p280 = pneg %p82
      %p281 = pneg %p79
      %p282 = pneg %p103
      %p283 = pneg %p100
      %p284 = pneg %p124
      %p285 = pneg %p121
      %p286 = pneg %p145
      %p287 = pneg %p142
      %p288 = pneg %p166
      %p289 = pneg %p163
      %p290 = pneg %p187
      %p291 = pneg %p184
      %p292 = pneg %p213
      %p293 = pneg %p210
      %s294 = smul.u32 2, %s19
      %p295 = scmp.lt.s32.totalorder %s294, 3
      %s296 = scalar_select %p295, %s294, 3
      %s297 = smul.addr %s296, 4
      %s298 = smul.addr %s297, 8
      %s299 = scalar_lea.vmem %s8, %s298
      %s300 = smul.u32 2, %s19
      %p301 = scmp.lt.s32.totalorder %s300, 3
      %s302 = scalar_select %p301, %s300, 3
      %s303 = smul.addr %s302, 4
      %s304 = smul.addr %s303, 8
      %s305 = scalar_lea.vmem %s0, %s304
      %s306 = smul.u32 2, %s19
      %s307 = smul.u32 2, %s19
      %p308 = scmp.lt.s32.totalorder %s307, 3
      %s309 = scalar_select %p308, %s307, 3
      %s310 = smul.addr %s309, 4
      %s311 = smul.addr %s310, 8
      %s312 = scalar_lea.vmem %s8, %s311
      %s313 = smul.u32 2, %s19
      %v315 = vld [vmem:[%s305] sm:$0xff]
      %v316 = vld [vmem:[%s305 + $0x8] sm:$0xff]
      %v317 = vld [vmem:[%s305 + $0x10] sm:$0xff]
      %v318 = vld [vmem:[%s305 + $0x18] sm:$0xff]
      %s319 = scalar_lea.vmem %s305, 32
      %v320 = vld [vmem:[%s319] sm:$0xff]
      %v321 = vld [vmem:[%s319 + $0x8] sm:$0xff]
      %v322 = vld [vmem:[%s319 + $0x10] sm:$0xff]
      %v323 = vld [vmem:[%s319 + $0x18] sm:$0xff]
      %v324 = vpack.c.bf16 %v317, %v315
      %v325 = vpack.c.bf16 %v318, %v316
      %v326 = vpack.c.bf16 %v322, %v320
      %v327 = vpack.c.bf16 %v323, %v321
      %v328 = vld [vmem:[%s3] sm:$0xf]
      %v329 = vld [vmem:[%s4] sm:$0xff]
      %331 = vset.pattern.permute.xlu0 0
      %332 = vperm.xlu0 %331, %v329
      %v333 = vpop.permute.xlu0 %332
      %vm335 = vcmask 130048
      %v337 = vsel %vm335, %v328, 0
      %339 = vmatprep.subr.bf16.mxu0 0
      %340 = vmatpush1.bf16.msra.mxu0 0
      %341 = vmatprep.subr.bf16.mxu0 0
      %342 = vmatpush1.bf16.msra.mxu0 0
      %343 = vmatprep.subr.bf16.mxu0 0
      %344 = vmatpush1.bf16.msra.mxu0 0
      %345 = vmatprep.subr.bf16.mxu0 0
      %346 = vmatpush1.bf16.msra.mxu0 0
      %347 = vmatprep.subr.bf16.mxu0 0
      %348 = vmatpush1.bf16.msra.mxu0 0
      %349 = vmatprep.subr.bf16.mxu0 0
      %350 = vmatpush1.bf16.msra.mxu0 0
      %351 = vmatprep.subr.bf16.mxu0 0
      %352 = vmatpush1.bf16.msra.mxu0 0
      %353 = vmatprep.subr.bf16.mxu0 %v325
      %354 = vmatpush1.bf16.msra.mxu0 %v324
      %355 = vmatprep.subr.bf16.mxu0 0
      %356 = vmatpush2.bf16.msra.mxu0 0
      %357 = vmatprep.subr.bf16.mxu0 0
      %358 = vmatpush2.bf16.msra.mxu0 0
      %359 = vmatprep.subr.bf16.mxu0 0
      %360 = vmatpush2.bf16.msra.mxu0 0
      %361 = vmatprep.subr.bf16.mxu0 0
      %362 = vmatpush2.bf16.msra.mxu0 0
      %363 = vmatprep.subr.bf16.mxu0 0
      %364 = vmatpush2.bf16.msra.mxu0 0
      %365 = vmatprep.subr.bf16.mxu0 0
      %366 = vmatpush2.bf16.msra.mxu0 0
      %367 = vmatprep.subr.bf16.mxu0 0
      %368 = vmatpush2.bf16.msra.mxu0 0
      %369 = vmatprep.subr.bf16.mxu0 0
      %370 = vmatpush2.bf16.msra.mxu0 0
      %371 = vmatprep.mubr.bf16.mxu0 0
      %372 = vmatmul.mubr.bf16.gmra.mxu0 %v337
      %v373 = vpop.f32.mrf.mxu0
      %v374 = vadd.f32 %v333, %v373
      %v375 = vpop.f32.mrf.mxu0
      %v376 = vadd.f32 %v333, %v375
      %v377 = vpop.f32.mrf.mxu0
      %v378 = vpop.f32.mrf.mxu0
      %379 = vdwg.mxu0
      %380 = vmatprep.subr.bf16.mxu0 0
      %381 = vmatpush1.bf16.msra.mxu0 0
      %382 = vmatprep.subr.bf16.mxu0 0
      %383 = vmatpush1.bf16.msra.mxu0 0
      %384 = vmatprep.subr.bf16.mxu0 0
      %385 = vmatpush1.bf16.msra.mxu0 0
      %386 = vmatprep.subr.bf16.mxu0 0
      %387 = vmatpush1.bf16.msra.mxu0 0
      %388 = vmatprep.subr.bf16.mxu0 0
      %389 = vmatpush1.bf16.msra.mxu0 0
      %390 = vmatprep.subr.bf16.mxu0 0
      %391 = vmatpush1.bf16.msra.mxu0 0
      %392 = vmatprep.subr.bf16.mxu0 0
      %393 = vmatpush1.bf16.msra.mxu0 0
      %394 = vmatprep.subr.bf16.mxu0 %v327
      %395 = vmatpush1.bf16.msra.mxu0 %v326
      %396 = vmatprep.subr.bf16.mxu0 0
      %397 = vmatpush2.bf16.msra.mxu0 0
      %398 = vmatprep.subr.bf16.mxu0 0
      %399 = vmatpush2.bf16.msra.mxu0 0
      %400 = vmatprep.subr.bf16.mxu0 0
      %401 = vmatpush2.bf16.msra.mxu0 0
      %402 = vmatprep.subr.bf16.mxu0 0
      %403 = vmatpush2.bf16.msra.mxu0 0
      %404 = vmatprep.subr.bf16.mxu0 0
      %405 = vmatpush2.bf16.msra.mxu0 0
      %406 = vmatprep.subr.bf16.mxu0 0
      %407 = vmatpush2.bf16.msra.mxu0 0
      %408 = vmatprep.subr.bf16.mxu0 0
      %409 = vmatpush2.bf16.msra.mxu0 0
      %410 = vmatprep.subr.bf16.mxu0 0
      %411 = vmatpush2.bf16.msra.mxu0 0
      %412 = vmatprep.mubr.bf16.mxu0 0
      %413 = vmatmul.mubr.bf16.gmra.mxu0 %v337
      %v414 = vpop.f32.mrf.mxu0
      %v415 = vadd.f32 %v333, %v414
      %v416 = vpop.f32.mrf.mxu0
      %v417 = vadd.f32 %v333, %v416
      %v418 = vpop.f32.mrf.mxu0
      %v419 = vpop.f32.mrf.mxu0
      %420 = vdwg.mxu0
      %v421 = vmax.f32 %v374, 0.0
      %v422 = vmax.f32 %v376, 0.0
      %v423 = vmax.f32 %v415, 0.0
      %v424 = vmax.f32 %v417, 0.0
      %v425 = vpack.c.bf16 %v421, %v421
      %v426 = vpack.c.bf16 %v422, %v422
      %v427 = vpack.c.bf16 %v423, %v423
      %v428 = vpack.c.bf16 %v424, %v424
      %v429 = vld [vmem:[%s2] sm:$0x1]
      %vm430 = vcmp.gt.f32.partialorder %v429, 0.0
      %v431 = vsel %vm430, 0.0, -1e+30
      %v432 = vld [vmem:[%s1] sm:$0xf]
      %v433 = vld [vmem:[%s1 + $0x4] sm:$0xf]
      %v434 = vld [vmem:[%s1 + $0x8] sm:$0xf]
      %v435 = vld [vmem:[%s1 + $0xc] sm:$0xf]
      %v436 = vld [vmem:[%s1 + $0x10] sm:$0xf]
      %v437 = vld [vmem:[%s1 + $0x14] sm:$0xf]
      %v438 = vld [vmem:[%s1 + $0x18] sm:$0xf]
      %v439 = vld [vmem:[%s1 + $0x1c] sm:$0xf]
      %v440 = vld [vmem:[%s1 + $0x20] sm:$0xf]
      %v441 = vld [vmem:[%s1 + $0x24] sm:$0xf]
      %v442 = vld [vmem:[%s1 + $0x28] sm:$0xf]
      %v443 = vld [vmem:[%s1 + $0x2c] sm:$0xf]
      %v444 = vld [vmem:[%s1 + $0x30] sm:$0xf]
      %v445 = vld [vmem:[%s1 + $0x34] sm:$0xf]
      %v446 = vld [vmem:[%s1 + $0x38] sm:$0xf]
      %v447 = vld [vmem:[%s1 + $0x3c] sm:$0xf]
      %v448 = vld [vmem:[%s1 + $0x40] sm:$0xf]
      %v449 = vld [vmem:[%s1 + $0x44] sm:$0xf]
      %v450 = vld [vmem:[%s1 + $0x48] sm:$0xf]
      %v451 = vld [vmem:[%s1 + $0x4c] sm:$0xf]
      %v452 = vld [vmem:[%s1 + $0x50] sm:$0xf]
      %v453 = vld [vmem:[%s1 + $0x54] sm:$0xf]
      %v454 = vld [vmem:[%s1 + $0x58] sm:$0xf]
      %v455 = vld [vmem:[%s1 + $0x5c] sm:$0xf]
      %v456 = vld [vmem:[%s1 + $0x60] sm:$0xf]
      %v457 = vld [vmem:[%s1 + $0x64] sm:$0xf]
      %v458 = vld [vmem:[%s1 + $0x68] sm:$0xf]
      %v459 = vld [vmem:[%s1 + $0x6c] sm:$0xf]
      %v460 = vld [vmem:[%s1 + $0x70] sm:$0xf]
      %v461 = vld [vmem:[%s1 + $0x74] sm:$0xf]
      %v462 = vld [vmem:[%s1 + $0x78] sm:$0xf]
      %v463 = vld [vmem:[%s1 + $0x7c] sm:$0xf]
      %v496 = vunpack.c.l.b16 %v432
      %v497 = vunpack.c.l.b16 %v433
      %v498 = vunpack.c.l.b16 %v434
      %v499 = vunpack.c.l.b16 %v435
      %v500 = vunpack.c.l.b16 %v436
      %v501 = vunpack.c.l.b16 %v437
      %v502 = vunpack.c.l.b16 %v438
      %v503 = vunpack.c.l.b16 %v439
      %v504 = vunpack.c.l.b16 %v440
      %v505 = vunpack.c.l.b16 %v441
      %v506 = vunpack.c.l.b16 %v442
      %v507 = vunpack.c.l.b16 %v443
      %v508 = vunpack.c.l.b16 %v444
      %v509 = vunpack.c.l.b16 %v445
      %v510 = vunpack.c.l.b16 %v446
      %v511 = vunpack.c.l.b16 %v447
      %v512 = vunpack.c.l.b16 %v448
      %v513 = vunpack.c.l.b16 %v449
      %v514 = vunpack.c.l.b16 %v450
      %v515 = vunpack.c.l.b16 %v451
      %v516 = vunpack.c.l.b16 %v452
      %v517 = vunpack.c.l.b16 %v453
      %v518 = vunpack.c.l.b16 %v454
      %v519 = vunpack.c.l.b16 %v455
      %v520 = vunpack.c.l.b16 %v456
      %v521 = vunpack.c.l.b16 %v457
      %v522 = vunpack.c.l.b16 %v458
      %v523 = vunpack.c.l.b16 %v459
      %v524 = vunpack.c.l.b16 %v460
      %v525 = vunpack.c.l.b16 %v461
      %v526 = vunpack.c.l.b16 %v462
      %v527 = vunpack.c.l.b16 %v463
      %v528 = vpack.c.b16 %v497, %v496
      %v529 = vpack.c.b16 %v499, %v498
      %v530 = vpack.c.b16 %v501, %v500
      %v531 = vpack.c.b16 %v503, %v502
      %v532 = vpack.c.b16 %v505, %v504
      %v533 = vpack.c.b16 %v507, %v506
      %v534 = vpack.c.b16 %v509, %v508
      %v535 = vpack.c.b16 %v511, %v510
      %v536 = vpack.c.b16 %v513, %v512
      %v537 = vpack.c.b16 %v515, %v514
      %v538 = vpack.c.b16 %v517, %v516
      %v539 = vpack.c.b16 %v519, %v518
      %v540 = vpack.c.b16 %v521, %v520
      %v541 = vpack.c.b16 %v523, %v522
      %v542 = vpack.c.b16 %v525, %v524
      %v543 = vpack.c.b16 %v527, %v526
      %560 = vmatprep.subr.bf16.mxu0 0
      %561 = vmatpush1.bf16.msra.mxu0 %v535
      %562 = vmatprep.subr.bf16.mxu0 0
      %563 = vmatpush1.bf16.msra.mxu0 %v534
      %564 = vmatprep.subr.bf16.mxu0 0
      %565 = vmatpush1.bf16.msra.mxu0 %v533
      %566 = vmatprep.subr.bf16.mxu0 0
      %567 = vmatpush1.bf16.msra.mxu0 %v532
      %568 = vmatprep.subr.bf16.mxu0 0
      %569 = vmatpush1.bf16.msra.mxu0 %v531
      %570 = vmatprep.subr.bf16.mxu0 0
      %571 = vmatpush1.bf16.msra.mxu0 %v530
      %572 = vmatprep.subr.bf16.mxu0 0
      %573 = vmatpush1.bf16.msra.mxu0 %v529
      %574 = vmatprep.subr.bf16.mxu0 0
      %575 = vmatpush1.bf16.msra.mxu0 %v528
      %576 = vmatprep.subr.bf16.mxu0 0
      %577 = vmatpush2.bf16.msra.mxu0 %v543
      %578 = vmatprep.subr.bf16.mxu0 0
      %579 = vmatpush2.bf16.msra.mxu0 %v542
      %580 = vmatprep.subr.bf16.mxu0 0
      %581 = vmatpush2.bf16.msra.mxu0 %v541
      %582 = vmatprep.subr.bf16.mxu0 0
      %583 = vmatpush2.bf16.msra.mxu0 %v540
      %584 = vmatprep.subr.bf16.mxu0 0
      %585 = vmatpush2.bf16.msra.mxu0 %v539
      %586 = vmatprep.subr.bf16.mxu0 0
      %587 = vmatpush2.bf16.msra.mxu0 %v538
      %588 = vmatprep.subr.bf16.mxu0 0
      %589 = vmatpush2.bf16.msra.mxu0 %v537
      %590 = vmatprep.subr.bf16.mxu0 0
      %591 = vmatpush2.bf16.msra.mxu0 %v536
      %592 = vmatprep.mubr.bf16.mxu0 %v426
      %593 = vmatmul.mubr.bf16.gmra.mxu0 %v425
      %v594 = vpop.f32.mrf.mxu0
      %v595 = vadd.f32 0.0, %v594
      %v596 = vpop.f32.mrf.mxu0
      %v597 = vpop.f32.mrf.mxu0
      %v598 = vpop.f32.mrf.mxu0
      %599 = vdwg.mxu0
      %v601 = vlaneseq
      %v602 = vshrl.u32 %v601, 7
      %v603 = vsub.s32 0, %v602
      %v604 = vrot.slane %v429, %v603
      %v606 = vmul.f32 %v595, %v604
      %v607 = vpack.c.bf16 %v606, %v606
      %v608 = vmul.f32 %v606, 0.35355338
      %v609 = vpack.c.bf16 %v608, %v608
      %v611 = vlaneseq
      %v612 = vshrl.u32 %v611, 7
      %v613 = vsub.s32 0, %v612
      %v614 = vrot.slane %v431, %v613
      %616 = vxpose.xlu0.c.b16.start [1/8] %v425, 128
      %617 = vxpose.xlu0.c.b16.cont [2/8] 0, 128
      %618 = vxpose.xlu0.c.b16.cont [3/8] 0, 128
      %619 = vxpose.xlu0.c.b16.cont [4/8] 0, 128
      %620 = vxpose.xlu0.c.b16.cont [5/8] 0, 128
      %621 = vxpose.xlu0.c.b16.cont [6/8] 0, 128
      %622 = vxpose.xlu0.c.b16.cont [7/8] 0, 128
      %623 = vxpose.xlu0.c.b16.end [8/8] 0, 128
      %v624 = vpop.trf.xlu0
      %v625 = vpop.trf.xlu0
      %v626 = vpop.trf.xlu0
      %v627 = vpop.trf.xlu0
      %v628 = vpop.trf.xlu0
      %v629 = vpop.trf.xlu0
      %v630 = vpop.trf.xlu0
      %v631 = vpop.trf.xlu0
      %632 = vxpose.xlu0.c.b16.start [1/8] %v426, 128
      %633 = vxpose.xlu0.c.b16.cont [2/8] 0, 128
      %634 = vxpose.xlu0.c.b16.cont [3/8] 0, 128
      %635 = vxpose.xlu0.c.b16.cont [4/8] 0, 128
      %636 = vxpose.xlu0.c.b16.cont [5/8] 0, 128
      %637 = vxpose.xlu0.c.b16.cont [6/8] 0, 128
      %638 = vxpose.xlu0.c.b16.cont [7/8] 0, 128
      %639 = vxpose.xlu0.c.b16.end [8/8] 0, 128
      %v640 = vpop.trf.xlu0
      %v641 = vpop.trf.xlu0
      %v642 = vpop.trf.xlu0
      %v643 = vpop.trf.xlu0
      %v644 = vpop.trf.xlu0
      %v645 = vpop.trf.xlu0
      %v646 = vpop.trf.xlu0
      %v647 = vpop.trf.xlu0
      %vm648 = vcmask 64512
      %v650 = vsel %vm648, %v624, 0
      %v653 = vsel %vm648, %v625, 0
      %v656 = vsel %vm648, %v626, 0
      %v659 = vsel %vm648, %v627, 0
      %v662 = vsel %vm648, %v628, 0
      %v665 = vsel %vm648, %v629, 0
      %v668 = vsel %vm648, %v630, 0
      %v671 = vsel %vm648, %v631, 0
      %v674 = vsel %vm648, %v640, 0
      %v677 = vsel %vm648, %v641, 0
      %v680 = vsel %vm648, %v642, 0
      %v683 = vsel %vm648, %v643, 0
      %v686 = vsel %vm648, %v644, 0
      %v689 = vsel %vm648, %v645, 0
      %v692 = vsel %vm648, %v646, 0
      %v695 = vsel %vm648, %v647, 0
      %vm697 = vcmask 1043456
      %v699 = vsel %vm697, %v609, 0
      %701 = vmatprep.subr.bf16.mxu0 0
      %702 = vmatpush1.bf16.msra.mxu0 0
      %703 = vmatprep.subr.bf16.mxu0 0
      %704 = vmatpush1.bf16.msra.mxu0 0
      %705 = vmatprep.subr.bf16.mxu0 0
      %706 = vmatpush1.bf16.msra.mxu0 0
      %707 = vmatprep.subr.bf16.mxu0 0
      %708 = vmatpush1.bf16.msra.mxu0 0
      %709 = vmatprep.subr.bf16.mxu0 0
      %710 = vmatpush1.bf16.msra.mxu0 0
      %711 = vmatprep.subr.bf16.mxu0 0
      %712 = vmatpush1.bf16.msra.mxu0 0
      %713 = vmatprep.subr.bf16.mxu0 0
      %714 = vmatpush1.bf16.msra.mxu0 0
      %715 = vmatprep.subr.bf16.mxu0 0
      %716 = vmatpush1.bf16.msra.mxu0 %v699
      %717 = vmatprep.subr.bf16.mxu0 0
      %718 = vmatpush2.bf16.msra.mxu0 0
      %719 = vmatprep.subr.bf16.mxu0 0
      %720 = vmatpush2.bf16.msra.mxu0 0
      %721 = vmatprep.subr.bf16.mxu0 0
      %722 = vmatpush2.bf16.msra.mxu0 0
      %723 = vmatprep.subr.bf16.mxu0 0
      %724 = vmatpush2.bf16.msra.mxu0 0
      %725 = vmatprep.subr.bf16.mxu0 0
      %726 = vmatpush2.bf16.msra.mxu0 0
      %727 = vmatprep.subr.bf16.mxu0 0
      %728 = vmatpush2.bf16.msra.mxu0 0
      %729 = vmatprep.subr.bf16.mxu0 0
      %730 = vmatpush2.bf16.msra.mxu0 0
      %731 = vmatprep.subr.bf16.mxu0 0
      %732 = vmatpush2.bf16.msra.mxu0 0
      %733 = vmatprep.mubr.bf16.mxu0 0
      %734 = vmatmul.mubr.bf16.gmra.mxu0 %v650
      %v735 = vpop.f32.mrf.mxu0
      %v736 = vadd.f32 %v614, %v735
      %v737 = vpop.f32.mrf.mxu0
      %v738 = vpop.f32.mrf.mxu0
      %v739 = vadd.f32 %v614, %v738
      %v740 = vpop.f32.mrf.mxu0
      %741 = vmatprep.mubr.bf16.mxu0 0
      %742 = vmatmul.mubr.bf16.gmra.mxu0 %v653
      %v743 = vpop.f32.mrf.mxu0
      %v744 = vadd.f32 %v614, %v743
      %v745 = vpop.f32.mrf.mxu0
      %v746 = vpop.f32.mrf.mxu0
      %v747 = vadd.f32 %v614, %v746
      %v748 = vpop.f32.mrf.mxu0
      %749 = vmatprep.mubr.bf16.mxu0 0
      %750 = vmatmul.mubr.bf16.gmra.mxu0 %v656
      %v751 = vpop.f32.mrf.mxu0
      %v752 = vadd.f32 %v614, %v751
      %v753 = vpop.f32.mrf.mxu0
      %v754 = vpop.f32.mrf.mxu0
      %v755 = vadd.f32 %v614, %v754
      %v756 = vpop.f32.mrf.mxu0
      %757 = vmatprep.mubr.bf16.mxu0 0
      %758 = vmatmul.mubr.bf16.gmra.mxu0 %v659
      %v759 = vpop.f32.mrf.mxu0
      %v760 = vadd.f32 %v614, %v759
      %v761 = vpop.f32.mrf.mxu0
      %v762 = vpop.f32.mrf.mxu0
      %v763 = vadd.f32 %v614, %v762
      %v764 = vpop.f32.mrf.mxu0
      %765 = vmatprep.mubr.bf16.mxu0 0
      %766 = vmatmul.mubr.bf16.gmra.mxu0 %v662
      %v767 = vpop.f32.mrf.mxu0
      %v768 = vadd.f32 %v614, %v767
      %v769 = vpop.f32.mrf.mxu0
      %v770 = vpop.f32.mrf.mxu0
      %v771 = vadd.f32 %v614, %v770
      %v772 = vpop.f32.mrf.mxu0
      %773 = vmatprep.mubr.bf16.mxu0 0
      %774 = vmatmul.mubr.bf16.gmra.mxu0 %v665
      %v775 = vpop.f32.mrf.mxu0
      %v776 = vadd.f32 %v614, %v775
      %v777 = vpop.f32.mrf.mxu0
      %v778 = vpop.f32.mrf.mxu0
      %v779 = vadd.f32 %v614, %v778
      %v780 = vpop.f32.mrf.mxu0
      %781 = vmatprep.mubr.bf16.mxu0 0
      %782 = vmatmul.mubr.bf16.gmra.mxu0 %v668
      %v783 = vpop.f32.mrf.mxu0
      %v784 = vadd.f32 %v614, %v783
      %v785 = vpop.f32.mrf.mxu0
      %v786 = vpop.f32.mrf.mxu0
      %v787 = vadd.f32 %v614, %v786
      %v788 = vpop.f32.mrf.mxu0
      %789 = vmatprep.mubr.bf16.mxu0 0
      %790 = vmatmul.mubr.bf16.gmra.mxu0 %v671
      %v791 = vpop.f32.mrf.mxu0
      %v792 = vadd.f32 %v614, %v791
      %v793 = vpop.f32.mrf.mxu0
      %v794 = vpop.f32.mrf.mxu0
      %v795 = vadd.f32 %v614, %v794
      %v796 = vpop.f32.mrf.mxu0
      %797 = vmatprep.mubr.bf16.mxu0 0
      %798 = vmatmul.mubr.bf16.gmra.mxu0 %v674
      %v799 = vpop.f32.mrf.mxu0
      %v800 = vadd.f32 %v614, %v799
      %v801 = vpop.f32.mrf.mxu0
      %v802 = vpop.f32.mrf.mxu0
      %v803 = vadd.f32 %v614, %v802
      %v804 = vpop.f32.mrf.mxu0
      %805 = vmatprep.mubr.bf16.mxu0 0
      %806 = vmatmul.mubr.bf16.gmra.mxu0 %v677
      %v807 = vpop.f32.mrf.mxu0
      %v808 = vadd.f32 %v614, %v807
      %v809 = vpop.f32.mrf.mxu0
      %v810 = vpop.f32.mrf.mxu0
      %v811 = vadd.f32 %v614, %v810
      %v812 = vpop.f32.mrf.mxu0
      %813 = vmatprep.mubr.bf16.mxu0 0
      %814 = vmatmul.mubr.bf16.gmra.mxu0 %v680
      %v815 = vpop.f32.mrf.mxu0
      %v816 = vadd.f32 %v614, %v815
      %v817 = vpop.f32.mrf.mxu0
      %v818 = vpop.f32.mrf.mxu0
      %v819 = vadd.f32 %v614, %v818
      %v820 = vpop.f32.mrf.mxu0
      %821 = vmatprep.mubr.bf16.mxu0 0
      %822 = vmatmul.mubr.bf16.gmra.mxu0 %v683
      %v823 = vpop.f32.mrf.mxu0
      %v824 = vadd.f32 %v614, %v823
      %v825 = vpop.f32.mrf.mxu0
      %v826 = vpop.f32.mrf.mxu0
      %v827 = vadd.f32 %v614, %v826
      %v828 = vpop.f32.mrf.mxu0
      %829 = vmatprep.mubr.bf16.mxu0 0
      %830 = vmatmul.mubr.bf16.gmra.mxu0 %v686
      %v831 = vpop.f32.mrf.mxu0
      %v832 = vadd.f32 %v614, %v831
      %v833 = vpop.f32.mrf.mxu0
      %v834 = vpop.f32.mrf.mxu0
      %v835 = vadd.f32 %v614, %v834
      %v836 = vpop.f32.mrf.mxu0
      %837 = vmatprep.mubr.bf16.mxu0 0
      %838 = vmatmul.mubr.bf16.gmra.mxu0 %v689
      %v839 = vpop.f32.mrf.mxu0
      %v840 = vadd.f32 %v614, %v839
      %v841 = vpop.f32.mrf.mxu0
      %v842 = vpop.f32.mrf.mxu0
      %v843 = vadd.f32 %v614, %v842
      %v844 = vpop.f32.mrf.mxu0
      %845 = vmatprep.mubr.bf16.mxu0 0
      %846 = vmatmul.mubr.bf16.gmra.mxu0 %v692
      %v847 = vpop.f32.mrf.mxu0
      %v848 = vadd.f32 %v614, %v847
      %v849 = vpop.f32.mrf.mxu0
      %v850 = vpop.f32.mrf.mxu0
      %v851 = vadd.f32 %v614, %v850
      %v852 = vpop.f32.mrf.mxu0
      %853 = vmatprep.mubr.bf16.mxu0 0
      %854 = vmatmul.mubr.bf16.gmra.mxu0 %v695
      %v855 = vpop.f32.mrf.mxu0
      %v856 = vadd.f32 %v614, %v855
      %v857 = vpop.f32.mrf.mxu0
      %v858 = vpop.f32.mrf.mxu0
      %v859 = vadd.f32 %v614, %v858
      %v860 = vpop.f32.mrf.mxu0
      %861 = vdwg.mxu0
      %862 = vmax.xlane.f32.xlu0 %v736
      %v863 = vpop.xlane.xlu0 %862
      %864 = vmax.xlane.f32.xlu0 %v739
      %v865 = vpop.xlane.xlu0 %864
      %866 = vmax.xlane.f32.xlu0 %v744
      %v867 = vpop.xlane.xlu0 %866
      %868 = vmax.xlane.f32.xlu0 %v747
      %v869 = vpop.xlane.xlu0 %868
      %870 = vmax.xlane.f32.xlu0 %v752
      %v871 = vpop.xlane.xlu0 %870
      %872 = vmax.xlane.f32.xlu0 %v755
      %v873 = vpop.xlane.xlu0 %872
      %874 = vmax.xlane.f32.xlu0 %v760
      %v875 = vpop.xlane.xlu0 %874
      %876 = vmax.xlane.f32.xlu0 %v763
      %v877 = vpop.xlane.xlu0 %876
      %878 = vmax.xlane.f32.xlu0 %v768
      %v879 = vpop.xlane.xlu0 %878
      %880 = vmax.xlane.f32.xlu0 %v771
      %v881 = vpop.xlane.xlu0 %880
      %882 = vmax.xlane.f32.xlu0 %v776
      %v883 = vpop.xlane.xlu0 %882
      %884 = vmax.xlane.f32.xlu0 %v779
      %v885 = vpop.xlane.xlu0 %884
      %886 = vmax.xlane.f32.xlu0 %v784
      %v887 = vpop.xlane.xlu0 %886
      %888 = vmax.xlane.f32.xlu0 %v787
      %v889 = vpop.xlane.xlu0 %888
      %890 = vmax.xlane.f32.xlu0 %v792
      %v891 = vpop.xlane.xlu0 %890
      %892 = vmax.xlane.f32.xlu0 %v795
      %v893 = vpop.xlane.xlu0 %892
      %894 = vmax.xlane.f32.xlu0 %v800
      %v895 = vpop.xlane.xlu0 %894
      %896 = vmax.xlane.f32.xlu0 %v803
      %v897 = vpop.xlane.xlu0 %896
      %898 = vmax.xlane.f32.xlu0 %v808
      %v899 = vpop.xlane.xlu0 %898
      %900 = vmax.xlane.f32.xlu0 %v811
      %v901 = vpop.xlane.xlu0 %900
      %902 = vmax.xlane.f32.xlu0 %v816
      %v903 = vpop.xlane.xlu0 %902
      %904 = vmax.xlane.f32.xlu0 %v819
      %v905 = vpop.xlane.xlu0 %904
      %906 = vmax.xlane.f32.xlu0 %v824
      %v907 = vpop.xlane.xlu0 %906
      %908 = vmax.xlane.f32.xlu0 %v827
      %v909 = vpop.xlane.xlu0 %908
      %910 = vmax.xlane.f32.xlu0 %v832
      %v911 = vpop.xlane.xlu0 %910
      %912 = vmax.xlane.f32.xlu0 %v835
      %v913 = vpop.xlane.xlu0 %912
      %914 = vmax.xlane.f32.xlu0 %v840
      %v915 = vpop.xlane.xlu0 %914
      %916 = vmax.xlane.f32.xlu0 %v843
      %v917 = vpop.xlane.xlu0 %916
      %918 = vmax.xlane.f32.xlu0 %v848
      %v919 = vpop.xlane.xlu0 %918
      %920 = vmax.xlane.f32.xlu0 %v851
      %v921 = vpop.xlane.xlu0 %920
      %922 = vmax.xlane.f32.xlu0 %v856
      %v923 = vpop.xlane.xlu0 %922
      %924 = vmax.xlane.f32.xlu0 %v859
      %v925 = vpop.xlane.xlu0 %924
      %v926 = vsub.f32 %v736, %v863
      %v927 = vsub.f32 %v739, %v865
      %v928 = vsub.f32 %v744, %v867
      %v929 = vsub.f32 %v747, %v869
      %v930 = vsub.f32 %v752, %v871
      %v931 = vsub.f32 %v755, %v873
      %v932 = vsub.f32 %v760, %v875
      %v933 = vsub.f32 %v763, %v877
      %v934 = vsub.f32 %v768, %v879
      %v935 = vsub.f32 %v771, %v881
      %v936 = vsub.f32 %v776, %v883
      %v937 = vsub.f32 %v779, %v885
      %v938 = vsub.f32 %v784, %v887
      %v939 = vsub.f32 %v787, %v889
      %v940 = vsub.f32 %v792, %v891
      %v941 = vsub.f32 %v795, %v893
      %v942 = vsub.f32 %v800, %v895
      %v943 = vsub.f32 %v803, %v897
      %v944 = vsub.f32 %v808, %v899
      %v945 = vsub.f32 %v811, %v901
      %v946 = vsub.f32 %v816, %v903
      %v947 = vsub.f32 %v819, %v905
      %v948 = vsub.f32 %v824, %v907
      %v949 = vsub.f32 %v827, %v909
      %v950 = vsub.f32 %v832, %v911
      %v951 = vsub.f32 %v835, %v913
      %v952 = vsub.f32 %v840, %v915
      %v953 = vsub.f32 %v843, %v917
      %v954 = vsub.f32 %v848, %v919
      %v955 = vsub.f32 %v851, %v921
      %v956 = vsub.f32 %v856, %v923
      %v957 = vsub.f32 %v859, %v925
      %v958 = vmul.f32 %v926, 1.442695
      %v959 = vpow.pop %v958
      %v960 = vmul.f32 %v927, 1.442695
      %v961 = vpow.pop %v960
      %v962 = vmul.f32 %v928, 1.442695
      %v963 = vpow.pop %v962
      %v964 = vmul.f32 %v929, 1.442695
      %v965 = vpow.pop %v964
      %v966 = vmul.f32 %v930, 1.442695
      %v967 = vpow.pop %v966
      %v968 = vmul.f32 %v931, 1.442695
      %v969 = vpow.pop %v968
      %v970 = vmul.f32 %v932, 1.442695
      %v971 = vpow.pop %v970
      %v972 = vmul.f32 %v933, 1.442695
      %v973 = vpow.pop %v972
      %v974 = vmul.f32 %v934, 1.442695
      %v975 = vpow.pop %v974
      %v976 = vmul.f32 %v935, 1.442695
      %v977 = vpow.pop %v976
      %v978 = vmul.f32 %v936, 1.442695
      %v979 = vpow.pop %v978
      %v980 = vmul.f32 %v937, 1.442695
      %v981 = vpow.pop %v980
      %v982 = vmul.f32 %v938, 1.442695
      %v983 = vpow.pop %v982
      %v984 = vmul.f32 %v939, 1.442695
      %v985 = vpow.pop %v984
      %v986 = vmul.f32 %v940, 1.442695
      %v987 = vpow.pop %v986
      %v988 = vmul.f32 %v941, 1.442695
      %v989 = vpow.pop %v988
      %v990 = vmul.f32 %v942, 1.442695
      %v991 = vpow.pop %v990
      %v992 = vmul.f32 %v943, 1.442695
      %v993 = vpow.pop %v992
      %v994 = vmul.f32 %v944, 1.442695
      %v995 = vpow.pop %v994
      %v996 = vmul.f32 %v945, 1.442695
      %v997 = vpow.pop %v996
      %v998 = vmul.f32 %v946, 1.442695
      %v999 = vpow.pop %v998
      %v1000 = vmul.f32 %v947, 1.442695
      %v1001 = vpow.pop %v1000
      %v1002 = vmul.f32 %v948, 1.442695
      %v1003 = vpow.pop %v1002
      %v1004 = vmul.f32 %v949, 1.442695
      %v1005 = vpow.pop %v1004
      %v1006 = vmul.f32 %v950, 1.442695
      %v1007 = vpow.pop %v1006
      %v1008 = vmul.f32 %v951, 1.442695
      %v1009 = vpow.pop %v1008
      %v1010 = vmul.f32 %v952, 1.442695
      %v1011 = vpow.pop %v1010
      %v1012 = vmul.f32 %v953, 1.442695
      %v1013 = vpow.pop %v1012
      %v1014 = vmul.f32 %v954, 1.442695
      %v1015 = vpow.pop %v1014
      %v1016 = vmul.f32 %v955, 1.442695
      %v1017 = vpow.pop %v1016
      %v1018 = vmul.f32 %v956, 1.442695
      %v1019 = vpow.pop %v1018
      %v1020 = vmul.f32 %v957, 1.442695
      %v1021 = vpow.pop %v1020
      %1022 = vadd.xlane.f32.xlu0 %v959
      %v1023 = vpop.xlane.xlu0 %1022
      %1024 = vadd.xlane.f32.xlu0 %v961
      %v1025 = vpop.xlane.xlu0 %1024
      %1026 = vadd.xlane.f32.xlu0 %v963
      %v1027 = vpop.xlane.xlu0 %1026
      %1028 = vadd.xlane.f32.xlu0 %v965
      %v1029 = vpop.xlane.xlu0 %1028
      %1030 = vadd.xlane.f32.xlu0 %v967
      %v1031 = vpop.xlane.xlu0 %1030
      %1032 = vadd.xlane.f32.xlu0 %v969
      %v1033 = vpop.xlane.xlu0 %1032
      %1034 = vadd.xlane.f32.xlu0 %v971
      %v1035 = vpop.xlane.xlu0 %1034
      %1036 = vadd.xlane.f32.xlu0 %v973
      %v1037 = vpop.xlane.xlu0 %1036
      %1038 = vadd.xlane.f32.xlu0 %v975
      %v1039 = vpop.xlane.xlu0 %1038
      %1040 = vadd.xlane.f32.xlu0 %v977
      %v1041 = vpop.xlane.xlu0 %1040
      %1042 = vadd.xlane.f32.xlu0 %v979
      %v1043 = vpop.xlane.xlu0 %1042
      %1044 = vadd.xlane.f32.xlu0 %v981
      %v1045 = vpop.xlane.xlu0 %1044
      %1046 = vadd.xlane.f32.xlu0 %v983
      %v1047 = vpop.xlane.xlu0 %1046
      %1048 = vadd.xlane.f32.xlu0 %v985
      %v1049 = vpop.xlane.xlu0 %1048
      %1050 = vadd.xlane.f32.xlu0 %v987
      %v1051 = vpop.xlane.xlu0 %1050
      %1052 = vadd.xlane.f32.xlu0 %v989
      %v1053 = vpop.xlane.xlu0 %1052
      %1054 = vadd.xlane.f32.xlu0 %v991
      %v1055 = vpop.xlane.xlu0 %1054
      %1056 = vadd.xlane.f32.xlu0 %v993
      %v1057 = vpop.xlane.xlu0 %1056
      %1058 = vadd.xlane.f32.xlu0 %v995
      %v1059 = vpop.xlane.xlu0 %1058
      %1060 = vadd.xlane.f32.xlu0 %v997
      %v1061 = vpop.xlane.xlu0 %1060
      %1062 = vadd.xlane.f32.xlu0 %v999
      %v1063 = vpop.xlane.xlu0 %1062
      %1064 = vadd.xlane.f32.xlu0 %v1001
      %v1065 = vpop.xlane.xlu0 %1064
      %1066 = vadd.xlane.f32.xlu0 %v1003
      %v1067 = vpop.xlane.xlu0 %1066
      %1068 = vadd.xlane.f32.xlu0 %v1005
      %v1069 = vpop.xlane.xlu0 %1068
      %1070 = vadd.xlane.f32.xlu0 %v1007
      %v1071 = vpop.xlane.xlu0 %1070
      %1072 = vadd.xlane.f32.xlu0 %v1009
      %v1073 = vpop.xlane.xlu0 %1072
      %1074 = vadd.xlane.f32.xlu0 %v1011
      %v1075 = vpop.xlane.xlu0 %1074
      %1076 = vadd.xlane.f32.xlu0 %v1013
      %v1077 = vpop.xlane.xlu0 %1076
      %1078 = vadd.xlane.f32.xlu0 %v1015
      %v1079 = vpop.xlane.xlu0 %1078
      %1080 = vadd.xlane.f32.xlu0 %v1017
      %v1081 = vpop.xlane.xlu0 %1080
      %1082 = vadd.xlane.f32.xlu0 %v1019
      %v1083 = vpop.xlane.xlu0 %1082
      %1084 = vadd.xlane.f32.xlu0 %v1021
      %v1085 = vpop.xlane.xlu0 %1084
      %v1086 = vrcp.pop %v1023
      %v1087 = vmul.f32 %v959, %v1086
      %v1088 = vrcp.pop %v1025
      %v1089 = vmul.f32 %v961, %v1088
      %v1090 = vrcp.pop %v1027
      %v1091 = vmul.f32 %v963, %v1090
      %v1092 = vrcp.pop %v1029
      %v1093 = vmul.f32 %v965, %v1092
      %v1094 = vrcp.pop %v1031
      %v1095 = vmul.f32 %v967, %v1094
      %v1096 = vrcp.pop %v1033
      %v1097 = vmul.f32 %v969, %v1096
      %v1098 = vrcp.pop %v1035
      %v1099 = vmul.f32 %v971, %v1098
      %v1100 = vrcp.pop %v1037
      %v1101 = vmul.f32 %v973, %v1100
      %v1102 = vrcp.pop %v1039
      %v1103 = vmul.f32 %v975, %v1102
      %v1104 = vrcp.pop %v1041
      %v1105 = vmul.f32 %v977, %v1104
      %v1106 = vrcp.pop %v1043
      %v1107 = vmul.f32 %v979, %v1106
      %v1108 = vrcp.pop %v1045
      %v1109 = vmul.f32 %v981, %v1108
      %v1110 = vrcp.pop %v1047
      %v1111 = vmul.f32 %v983, %v1110
      %v1112 = vrcp.pop %v1049
      %v1113 = vmul.f32 %v985, %v1112
      %v1114 = vrcp.pop %v1051
      %v1115 = vmul.f32 %v987, %v1114
      %v1116 = vrcp.pop %v1053
      %v1117 = vmul.f32 %v989, %v1116
      %v1118 = vrcp.pop %v1055
      %v1119 = vmul.f32 %v991, %v1118
      %v1120 = vrcp.pop %v1057
      %v1121 = vmul.f32 %v993, %v1120
      %v1122 = vrcp.pop %v1059
      %v1123 = vmul.f32 %v995, %v1122
      %v1124 = vrcp.pop %v1061
      %v1125 = vmul.f32 %v997, %v1124
      %v1126 = vrcp.pop %v1063
      %v1127 = vmul.f32 %v999, %v1126
      %v1128 = vrcp.pop %v1065
      %v1129 = vmul.f32 %v1001, %v1128
      %v1130 = vrcp.pop %v1067
      %v1131 = vmul.f32 %v1003, %v1130
      %v1132 = vrcp.pop %v1069
      %v1133 = vmul.f32 %v1005, %v1132
      %v1134 = vrcp.pop %v1071
      %v1135 = vmul.f32 %v1007, %v1134
      %v1136 = vrcp.pop %v1073
      %v1137 = vmul.f32 %v1009, %v1136
      %v1138 = vrcp.pop %v1075
      %v1139 = vmul.f32 %v1011, %v1138
      %v1140 = vrcp.pop %v1077
      %v1141 = vmul.f32 %v1013, %v1140
      %v1142 = vrcp.pop %v1079
      %v1143 = vmul.f32 %v1015, %v1142
      %v1144 = vrcp.pop %v1081
      %v1145 = vmul.f32 %v1017, %v1144
      %v1146 = vrcp.pop %v1083
      %v1147 = vmul.f32 %v1019, %v1146
      %v1148 = vrcp.pop %v1085
      %v1149 = vmul.f32 %v1021, %v1148
      %v1150 = vpack.c.bf16 %v1089, %v1087
      %v1151 = vpack.c.bf16 %v1093, %v1091
      %v1152 = vpack.c.bf16 %v1097, %v1095
      %v1153 = vpack.c.bf16 %v1101, %v1099
      %v1154 = vpack.c.bf16 %v1105, %v1103
      %v1155 = vpack.c.bf16 %v1109, %v1107
      %v1156 = vpack.c.bf16 %v1113, %v1111
      %v1157 = vpack.c.bf16 %v1117, %v1115
      %v1158 = vpack.c.bf16 %v1121, %v1119
      %v1159 = vpack.c.bf16 %v1125, %v1123
      %v1160 = vpack.c.bf16 %v1129, %v1127
      %v1161 = vpack.c.bf16 %v1133, %v1131
      %v1162 = vpack.c.bf16 %v1137, %v1135
      %v1163 = vpack.c.bf16 %v1141, %v1139
      %v1164 = vpack.c.bf16 %v1145, %v1143
      %v1165 = vpack.c.bf16 %v1149, %v1147
      %1166 = vmatprep.subr.bf16.mxu0 0
      %1167 = vmatpush1.bf16.xpose.msra.mxu0 %v1157
      %1168 = vmatprep.subr.bf16.mxu0 0
      %1169 = vmatpush1.bf16.xpose.msra.mxu0 %v1156
      %1170 = vmatprep.subr.bf16.mxu0 0
      %1171 = vmatpush1.bf16.xpose.msra.mxu0 %v1155
      %1172 = vmatprep.subr.bf16.mxu0 0
      %1173 = vmatpush1.bf16.xpose.msra.mxu0 %v1154
      %1174 = vmatprep.subr.bf16.mxu0 0
      %1175 = vmatpush1.bf16.xpose.msra.mxu0 %v1153
      %1176 = vmatprep.subr.bf16.mxu0 0
      %1177 = vmatpush1.bf16.xpose.msra.mxu0 %v1152
      %1178 = vmatprep.subr.bf16.mxu0 0
      %1179 = vmatpush1.bf16.xpose.msra.mxu0 %v1151
      %1180 = vmatprep.subr.bf16.mxu0 0
      %1181 = vmatpush1.bf16.xpose.msra.mxu0 %v1150
      %1182 = vmatprep.subr.bf16.mxu0 0
      %1183 = vmatpush2.bf16.xpose.msra.mxu0 %v1165
      %1184 = vmatprep.subr.bf16.mxu0 0
      %1185 = vmatpush2.bf16.xpose.msra.mxu0 %v1164
      %1186 = vmatprep.subr.bf16.mxu0 0
      %1187 = vmatpush2.bf16.xpose.msra.mxu0 %v1163
      %1188 = vmatprep.subr.bf16.mxu0 0
      %1189 = vmatpush2.bf16.xpose.msra.mxu0 %v1162
      %1190 = vmatprep.subr.bf16.mxu0 0
      %1191 = vmatpush2.bf16.xpose.msra.mxu0 %v1161
      %1192 = vmatprep.subr.bf16.mxu0 0
      %1193 = vmatpush2.bf16.xpose.msra.mxu0 %v1160
      %1194 = vmatprep.subr.bf16.mxu0 0
      %1195 = vmatpush2.bf16.xpose.msra.mxu0 %v1159
      %1196 = vmatprep.subr.bf16.mxu0 0
      %1197 = vmatpush2.bf16.xpose.msra.mxu0 %v1158
      %1198 = vmatprep.mubr.bf16.mxu0 0
      %1199 = vmatmul.mubr.bf16.gmra.mxu0 %v607
      %v1200 = vpop.f32.mrf.mxu0
      %v1201 = vadd.f32 0.0, %v1200
      %v1202 = vpop.f32.mrf.mxu0
      %v1203 = vadd.f32 0.0, %v1202
      %v1204 = vpop.f32.mrf.mxu0
      %v1205 = vpop.f32.mrf.mxu0
      %1206 = vdwg.mxu0
      %1207 = vmatprep.subr.bf16.mxu0 0
      %1208 = vmatpush1.bf16.msra.mxu0 %v535
      %1209 = vmatprep.subr.bf16.mxu0 0
      %1210 = vmatpush1.bf16.msra.mxu0 %v534
      %1211 = vmatprep.subr.bf16.mxu0 0
      %1212 = vmatpush1.bf16.msra.mxu0 %v533
      %1213 = vmatprep.subr.bf16.mxu0 0
      %1214 = vmatpush1.bf16.msra.mxu0 %v532
      %1215 = vmatprep.subr.bf16.mxu0 0
      %1216 = vmatpush1.bf16.msra.mxu0 %v531
      %1217 = vmatprep.subr.bf16.mxu0 0
      %1218 = vmatpush1.bf16.msra.mxu0 %v530
      %1219 = vmatprep.subr.bf16.mxu0 0
      %1220 = vmatpush1.bf16.msra.mxu0 %v529
      %1221 = vmatprep.subr.bf16.mxu0 0
      %1222 = vmatpush1.bf16.msra.mxu0 %v528
      %1223 = vmatprep.subr.bf16.mxu0 0
      %1224 = vmatpush2.bf16.msra.mxu0 %v543
      %1225 = vmatprep.subr.bf16.mxu0 0
      %1226 = vmatpush2.bf16.msra.mxu0 %v542
      %1227 = vmatprep.subr.bf16.mxu0 0
      %1228 = vmatpush2.bf16.msra.mxu0 %v541
      %1229 = vmatprep.subr.bf16.mxu0 0
      %1230 = vmatpush2.bf16.msra.mxu0 %v540
      %1231 = vmatprep.subr.bf16.mxu0 0
      %1232 = vmatpush2.bf16.msra.mxu0 %v539
      %1233 = vmatprep.subr.bf16.mxu0 0
      %1234 = vmatpush2.bf16.msra.mxu0 %v538
      %1235 = vmatprep.subr.bf16.mxu0 0
      %1236 = vmatpush2.bf16.msra.mxu0 %v537
      %1237 = vmatprep.subr.bf16.mxu0 0
      %1238 = vmatpush2.bf16.msra.mxu0 %v536
      %1239 = vmatprep.mubr.bf16.mxu0 %v428
      %1240 = vmatmul.mubr.bf16.gmra.mxu0 %v427
      %v1241 = vpop.f32.mrf.mxu0
      %v1242 = vadd.f32 0.0, %v1241
      %v1243 = vpop.f32.mrf.mxu0
      %v1244 = vpop.f32.mrf.mxu0
      %v1245 = vpop.f32.mrf.mxu0
      %1246 = vdwg.mxu0
      %v1247 = vmul.f32 %v1242, %v604
      %v1248 = vpack.c.bf16 %v1247, %v1247
      %v1249 = vmul.f32 %v1247, 0.35355338
      %v1250 = vpack.c.bf16 %v1249, %v1249
      %1251 = vxpose.xlu0.c.b16.start [1/8] %v427, 128
      %1252 = vxpose.xlu0.c.b16.cont [2/8] 0, 128
      %1253 = vxpose.xlu0.c.b16.cont [3/8] 0, 128
      %1254 = vxpose.xlu0.c.b16.cont [4/8] 0, 128
      %1255 = vxpose.xlu0.c.b16.cont [5/8] 0, 128
      %1256 = vxpose.xlu0.c.b16.cont [6/8] 0, 128
      %1257 = vxpose.xlu0.c.b16.cont [7/8] 0, 128
      %1258 = vxpose.xlu0.c.b16.end [8/8] 0, 128
      %v1259 = vpop.trf.xlu0
      %v1260 = vpop.trf.xlu0
      %v1261 = vpop.trf.xlu0
      %v1262 = vpop.trf.xlu0
      %v1263 = vpop.trf.xlu0
      %v1264 = vpop.trf.xlu0
      %v1265 = vpop.trf.xlu0
      %v1266 = vpop.trf.xlu0
      %1267 = vxpose.xlu0.c.b16.start [1/8] %v428, 128
      %1268 = vxpose.xlu0.c.b16.cont [2/8] 0, 128
      %1269 = vxpose.xlu0.c.b16.cont [3/8] 0, 128
      %1270 = vxpose.xlu0.c.b16.cont [4/8] 0, 128
      %1271 = vxpose.xlu0.c.b16.cont [5/8] 0, 128
      %1272 = vxpose.xlu0.c.b16.cont [6/8] 0, 128
      %1273 = vxpose.xlu0.c.b16.cont [7/8] 0, 128
      %1274 = vxpose.xlu0.c.b16.end [8/8] 0, 128
      %v1275 = vpop.trf.xlu0
      %v1276 = vpop.trf.xlu0
      %v1277 = vpop.trf.xlu0
      %v1278 = vpop.trf.xlu0
      %v1279 = vpop.trf.xlu0
      %v1280 = vpop.trf.xlu0
      %v1281 = vpop.trf.xlu0
      %v1282 = vpop.trf.xlu0
      %v1284 = vsel %vm648, %v1259, 0
      %v1287 = vsel %vm648, %v1260, 0
      %v1290 = vsel %vm648, %v1261, 0
      %v1293 = vsel %vm648, %v1262, 0
      %v1296 = vsel %vm648, %v1263, 0
      %v1299 = vsel %vm648, %v1264, 0
      %v1302 = vsel %vm648, %v1265, 0
      %v1305 = vsel %vm648, %v1266, 0
      %v1308 = vsel %vm648, %v1275, 0
      %v1311 = vsel %vm648, %v1276, 0
      %v1314 = vsel %vm648, %v1277, 0
      %v1317 = vsel %vm648, %v1278, 0
      %v1320 = vsel %vm648, %v1279, 0
      %v1323 = vsel %vm648, %v1280, 0
      %v1326 = vsel %vm648, %v1281, 0
      %v1329 = vsel %vm648, %v1282, 0
      %v1332 = vsel %vm697, %v1250, 0
      %1334 = vmatprep.subr.bf16.mxu0 0
      %1335 = vmatpush1.bf16.msra.mxu0 0
      %1336 = vmatprep.subr.bf16.mxu0 0
      %1337 = vmatpush1.bf16.msra.mxu0 0
      %1338 = vmatprep.subr.bf16.mxu0 0
      %1339 = vmatpush1.bf16.msra.mxu0 0
      %1340 = vmatprep.subr.bf16.mxu0 0
      %1341 = vmatpush1.bf16.msra.mxu0 0
      %1342 = vmatprep.subr.bf16.mxu0 0
      %1343 = vmatpush1.bf16.msra.mxu0 0
      %1344 = vmatprep.subr.bf16.mxu0 0
      %1345 = vmatpush1.bf16.msra.mxu0 0
      %1346 = vmatprep.subr.bf16.mxu0 0
      %1347 = vmatpush1.bf16.msra.mxu0 0
      %1348 = vmatprep.subr.bf16.mxu0 0
      %1349 = vmatpush1.bf16.msra.mxu0 %v1332
      %1350 = vmatprep.subr.bf16.mxu0 0
      %1351 = vmatpush2.bf16.msra.mxu0 0
      %1352 = vmatprep.subr.bf16.mxu0 0
      %1353 = vmatpush2.bf16.msra.mxu0 0
      %1354 = vmatprep.subr.bf16.mxu0 0
      %1355 = vmatpush2.bf16.msra.mxu0 0
      %1356 = vmatprep.subr.bf16.mxu0 0
      %1357 = vmatpush2.bf16.msra.mxu0 0
      %1358 = vmatprep.subr.bf16.mxu0 0
      %1359 = vmatpush2.bf16.msra.mxu0 0
      %1360 = vmatprep.subr.bf16.mxu0 0
      %1361 = vmatpush2.bf16.msra.mxu0 0
      %1362 = vmatprep.subr.bf16.mxu0 0
      %1363 = vmatpush2.bf16.msra.mxu0 0
      %1364 = vmatprep.subr.bf16.mxu0 0
      %1365 = vmatpush2.bf16.msra.mxu0 0
      %1366 = vmatprep.mubr.bf16.mxu0 0
      %1367 = vmatmul.mubr.bf16.gmra.mxu0 %v1284
      %v1368 = vpop.f32.mrf.mxu0
      %v1369 = vadd.f32 %v614, %v1368
      %v1370 = vpop.f32.mrf.mxu0
      %v1371 = vpop.f32.mrf.mxu0
      %v1372 = vadd.f32 %v614, %v1371
      %v1373 = vpop.f32.mrf.mxu0
      %1374 = vmatprep.mubr.bf16.mxu0 0
      %1375 = vmatmul.mubr.bf16.gmra.mxu0 %v1287
      %v1376 = vpop.f32.mrf.mxu0
      %v1377 = vadd.f32 %v614, %v1376
      %v1378 = vpop.f32.mrf.mxu0
      %v1379 = vpop.f32.mrf.mxu0
      %v1380 = vadd.f32 %v614, %v1379
      %v1381 = vpop.f32.mrf.mxu0
      %1382 = vmatprep.mubr.bf16.mxu0 0
      %1383 = vmatmul.mubr.bf16.gmra.mxu0 %v1290
      %v1384 = vpop.f32.mrf.mxu0
      %v1385 = vadd.f32 %v614, %v1384
      %v1386 = vpop.f32.mrf.mxu0
      %v1387 = vpop.f32.mrf.mxu0
      %v1388 = vadd.f32 %v614, %v1387
      %v1389 = vpop.f32.mrf.mxu0
      %1390 = vmatprep.mubr.bf16.mxu0 0
      %1391 = vmatmul.mubr.bf16.gmra.mxu0 %v1293
      %v1392 = vpop.f32.mrf.mxu0
      %v1393 = vadd.f32 %v614, %v1392
      %v1394 = vpop.f32.mrf.mxu0
      %v1395 = vpop.f32.mrf.mxu0
      %v1396 = vadd.f32 %v614, %v1395
      %v1397 = vpop.f32.mrf.mxu0
      %1398 = vmatprep.mubr.bf16.mxu0 0
      %1399 = vmatmul.mubr.bf16.gmra.mxu0 %v1296
      %v1400 = vpop.f32.mrf.mxu0
      %v1401 = vadd.f32 %v614, %v1400
      %v1402 = vpop.f32.mrf.mxu0
      %v1403 = vpop.f32.mrf.mxu0
      %v1404 = vadd.f32 %v614, %v1403
      %v1405 = vpop.f32.mrf.mxu0
      %1406 = vmatprep.mubr.bf16.mxu0 0
      %1407 = vmatmul.mubr.bf16.gmra.mxu0 %v1299
      %v1408 = vpop.f32.mrf.mxu0
      %v1409 = vadd.f32 %v614, %v1408
      %v1410 = vpop.f32.mrf.mxu0
      %v1411 = vpop.f32.mrf.mxu0
      %v1412 = vadd.f32 %v614, %v1411
      %v1413 = vpop.f32.mrf.mxu0
      %1414 = vmatprep.mubr.bf16.mxu0 0
      %1415 = vmatmul.mubr.bf16.gmra.mxu0 %v1302
      %v1416 = vpop.f32.mrf.mxu0
      %v1417 = vadd.f32 %v614, %v1416
      %v1418 = vpop.f32.mrf.mxu0
      %v1419 = vpop.f32.mrf.mxu0
      %v1420 = vadd.f32 %v614, %v1419
      %v1421 = vpop.f32.mrf.mxu0
      %1422 = vmatprep.mubr.bf16.mxu0 0
      %1423 = vmatmul.mubr.bf16.gmra.mxu0 %v1305
      %v1424 = vpop.f32.mrf.mxu0
      %v1425 = vadd.f32 %v614, %v1424
      %v1426 = vpop.f32.mrf.mxu0
      %v1427 = vpop.f32.mrf.mxu0
      %v1428 = vadd.f32 %v614, %v1427
      %v1429 = vpop.f32.mrf.mxu0
      %1430 = vmatprep.mubr.bf16.mxu0 0
      %1431 = vmatmul.mubr.bf16.gmra.mxu0 %v1308
      %v1432 = vpop.f32.mrf.mxu0
      %v1433 = vadd.f32 %v614, %v1432
      %v1434 = vpop.f32.mrf.mxu0
      %v1435 = vpop.f32.mrf.mxu0
      %v1436 = vadd.f32 %v614, %v1435
      %v1437 = vpop.f32.mrf.mxu0
      %1438 = vmatprep.mubr.bf16.mxu0 0
      %1439 = vmatmul.mubr.bf16.gmra.mxu0 %v1311
      %v1440 = vpop.f32.mrf.mxu0
      %v1441 = vadd.f32 %v614, %v1440
      %v1442 = vpop.f32.mrf.mxu0
      %v1443 = vpop.f32.mrf.mxu0
      %v1444 = vadd.f32 %v614, %v1443
      %v1445 = vpop.f32.mrf.mxu0
      %1446 = vmatprep.mubr.bf16.mxu0 0
      %1447 = vmatmul.mubr.bf16.gmra.mxu0 %v1314
      %v1448 = vpop.f32.mrf.mxu0
      %v1449 = vadd.f32 %v614, %v1448
      %v1450 = vpop.f32.mrf.mxu0
      %v1451 = vpop.f32.mrf.mxu0
      %v1452 = vadd.f32 %v614, %v1451
      %v1453 = vpop.f32.mrf.mxu0
      %1454 = vmatprep.mubr.bf16.mxu0 0
      %1455 = vmatmul.mubr.bf16.gmra.mxu0 %v1317
      %v1456 = vpop.f32.mrf.mxu0
      %v1457 = vadd.f32 %v614, %v1456
      %v1458 = vpop.f32.mrf.mxu0
      %v1459 = vpop.f32.mrf.mxu0
      %v1460 = vadd.f32 %v614, %v1459
      %v1461 = vpop.f32.mrf.mxu0
      %1462 = vmatprep.mubr.bf16.mxu0 0
      %1463 = vmatmul.mubr.bf16.gmra.mxu0 %v1320
      %v1464 = vpop.f32.mrf.mxu0
      %v1465 = vadd.f32 %v614, %v1464
      %v1466 = vpop.f32.mrf.mxu0
      %v1467 = vpop.f32.mrf.mxu0
      %v1468 = vadd.f32 %v614, %v1467
      %v1469 = vpop.f32.mrf.mxu0
      %1470 = vmatprep.mubr.bf16.mxu0 0
      %1471 = vmatmul.mubr.bf16.gmra.mxu0 %v1323
      %v1472 = vpop.f32.mrf.mxu0
      %v1473 = vadd.f32 %v614, %v1472
      %v1474 = vpop.f32.mrf.mxu0
      %v1475 = vpop.f32.mrf.mxu0
      %v1476 = vadd.f32 %v614, %v1475
      %v1477 = vpop.f32.mrf.mxu0
      %1478 = vmatprep.mubr.bf16.mxu0 0
      %1479 = vmatmul.mubr.bf16.gmra.mxu0 %v1326
      %v1480 = vpop.f32.mrf.mxu0
      %v1481 = vadd.f32 %v614, %v1480
      %v1482 = vpop.f32.mrf.mxu0
      %v1483 = vpop.f32.mrf.mxu0
      %v1484 = vadd.f32 %v614, %v1483
      %v1485 = vpop.f32.mrf.mxu0
      %1486 = vmatprep.mubr.bf16.mxu0 0
      %1487 = vmatmul.mubr.bf16.gmra.mxu0 %v1329
      %v1488 = vpop.f32.mrf.mxu0
      %v1489 = vadd.f32 %v614, %v1488
      %v1490 = vpop.f32.mrf.mxu0
      %v1491 = vpop.f32.mrf.mxu0
      %v1492 = vadd.f32 %v614, %v1491
      %v1493 = vpop.f32.mrf.mxu0
      %1494 = vdwg.mxu0
      %1495 = vmax.xlane.f32.xlu0 %v1369
      %v1496 = vpop.xlane.xlu0 %1495
      %1497 = vmax.xlane.f32.xlu0 %v1372
      %v1498 = vpop.xlane.xlu0 %1497
      %1499 = vmax.xlane.f32.xlu0 %v1377
      %v1500 = vpop.xlane.xlu0 %1499
      %1501 = vmax.xlane.f32.xlu0 %v1380
      %v1502 = vpop.xlane.xlu0 %1501
      %1503 = vmax.xlane.f32.xlu0 %v1385
      %v1504 = vpop.xlane.xlu0 %1503
      %1505 = vmax.xlane.f32.xlu0 %v1388
      %v1506 = vpop.xlane.xlu0 %1505
      %1507 = vmax.xlane.f32.xlu0 %v1393
      %v1508 = vpop.xlane.xlu0 %1507
      %1509 = vmax.xlane.f32.xlu0 %v1396
      %v1510 = vpop.xlane.xlu0 %1509
      %1511 = vmax.xlane.f32.xlu0 %v1401
      %v1512 = vpop.xlane.xlu0 %1511
      %1513 = vmax.xlane.f32.xlu0 %v1404
      %v1514 = vpop.xlane.xlu0 %1513
      %1515 = vmax.xlane.f32.xlu0 %v1409
      %v1516 = vpop.xlane.xlu0 %1515
      %1517 = vmax.xlane.f32.xlu0 %v1412
      %v1518 = vpop.xlane.xlu0 %1517
      %1519 = vmax.xlane.f32.xlu0 %v1417
      %v1520 = vpop.xlane.xlu0 %1519
      %1521 = vmax.xlane.f32.xlu0 %v1420
      %v1522 = vpop.xlane.xlu0 %1521
      %1523 = vmax.xlane.f32.xlu0 %v1425
      %v1524 = vpop.xlane.xlu0 %1523
      %1525 = vmax.xlane.f32.xlu0 %v1428
      %v1526 = vpop.xlane.xlu0 %1525
      %1527 = vmax.xlane.f32.xlu0 %v1433
      %v1528 = vpop.xlane.xlu0 %1527
      %1529 = vmax.xlane.f32.xlu0 %v1436
      %v1530 = vpop.xlane.xlu0 %1529
      %1531 = vmax.xlane.f32.xlu0 %v1441
      %v1532 = vpop.xlane.xlu0 %1531
      %1533 = vmax.xlane.f32.xlu0 %v1444
      %v1534 = vpop.xlane.xlu0 %1533
      %1535 = vmax.xlane.f32.xlu0 %v1449
      %v1536 = vpop.xlane.xlu0 %1535
      %1537 = vmax.xlane.f32.xlu0 %v1452
      %v1538 = vpop.xlane.xlu0 %1537
      %1539 = vmax.xlane.f32.xlu0 %v1457
      %v1540 = vpop.xlane.xlu0 %1539
      %1541 = vmax.xlane.f32.xlu0 %v1460
      %v1542 = vpop.xlane.xlu0 %1541
      %1543 = vmax.xlane.f32.xlu0 %v1465
      %v1544 = vpop.xlane.xlu0 %1543
      %1545 = vmax.xlane.f32.xlu0 %v1468
      %v1546 = vpop.xlane.xlu0 %1545
      %1547 = vmax.xlane.f32.xlu0 %v1473
      %v1548 = vpop.xlane.xlu0 %1547
      %1549 = vmax.xlane.f32.xlu0 %v1476
      %v1550 = vpop.xlane.xlu0 %1549
      %1551 = vmax.xlane.f32.xlu0 %v1481
      %v1552 = vpop.xlane.xlu0 %1551
      %1553 = vmax.xlane.f32.xlu0 %v1484
      %v1554 = vpop.xlane.xlu0 %1553
      %1555 = vmax.xlane.f32.xlu0 %v1489
      %v1556 = vpop.xlane.xlu0 %1555
      %1557 = vmax.xlane.f32.xlu0 %v1492
      %v1558 = vpop.xlane.xlu0 %1557
      %v1559 = vsub.f32 %v1369, %v1496
      %v1560 = vsub.f32 %v1372, %v1498
      %v1561 = vsub.f32 %v1377, %v1500
      %v1562 = vsub.f32 %v1380, %v1502
      %v1563 = vsub.f32 %v1385, %v1504
      %v1564 = vsub.f32 %v1388, %v1506
      %v1565 = vsub.f32 %v1393, %v1508
      %v1566 = vsub.f32 %v1396, %v1510
      %v1567 = vsub.f32 %v1401, %v1512
      %v1568 = vsub.f32 %v1404, %v1514
      %v1569 = vsub.f32 %v1409, %v1516
      %v1570 = vsub.f32 %v1412, %v1518
      %v1571 = vsub.f32 %v1417, %v1520
      %v1572 = vsub.f32 %v1420, %v1522
      %v1573 = vsub.f32 %v1425, %v1524
      %v1574 = vsub.f32 %v1428, %v1526
      %v1575 = vsub.f32 %v1433, %v1528
      %v1576 = vsub.f32 %v1436, %v1530
      %v1577 = vsub.f32 %v1441, %v1532
      %v1578 = vsub.f32 %v1444, %v1534
      %v1579 = vsub.f32 %v1449, %v1536
      %v1580 = vsub.f32 %v1452, %v1538
      %v1581 = vsub.f32 %v1457, %v1540
      %v1582 = vsub.f32 %v1460, %v1542
      %v1583 = vsub.f32 %v1465, %v1544
      %v1584 = vsub.f32 %v1468, %v1546
      %v1585 = vsub.f32 %v1473, %v1548
      %v1586 = vsub.f32 %v1476, %v1550
      %v1587 = vsub.f32 %v1481, %v1552
      %v1588 = vsub.f32 %v1484, %v1554
      %v1589 = vsub.f32 %v1489, %v1556
      %v1590 = vsub.f32 %v1492, %v1558
      %v1591 = vmul.f32 %v1559, 1.442695
      %v1592 = vpow.pop %v1591
      %v1593 = vmul.f32 %v1560, 1.442695
      %v1594 = vpow.pop %v1593
      %v1595 = vmul.f32 %v1561, 1.442695
      %v1596 = vpow.pop %v1595
      %v1597 = vmul.f32 %v1562, 1.442695
      %v1598 = vpow.pop %v1597
      %v1599 = vmul.f32 %v1563, 1.442695
      %v1600 = vpow.pop %v1599
      %v1601 = vmul.f32 %v1564, 1.442695
      %v1602 = vpow.pop %v1601
      %v1603 = vmul.f32 %v1565, 1.442695
      %v1604 = vpow.pop %v1603
      %v1605 = vmul.f32 %v1566, 1.442695
      %v1606 = vpow.pop %v1605
      %v1607 = vmul.f32 %v1567, 1.442695
      %v1608 = vpow.pop %v1607
      %v1609 = vmul.f32 %v1568, 1.442695
      %v1610 = vpow.pop %v1609
      %v1611 = vmul.f32 %v1569, 1.442695
      %v1612 = vpow.pop %v1611
      %v1613 = vmul.f32 %v1570, 1.442695
      %v1614 = vpow.pop %v1613
      %v1615 = vmul.f32 %v1571, 1.442695
      %v1616 = vpow.pop %v1615
      %v1617 = vmul.f32 %v1572, 1.442695
      %v1618 = vpow.pop %v1617
      %v1619 = vmul.f32 %v1573, 1.442695
      %v1620 = vpow.pop %v1619
      %v1621 = vmul.f32 %v1574, 1.442695
      %v1622 = vpow.pop %v1621
      %v1623 = vmul.f32 %v1575, 1.442695
      %v1624 = vpow.pop %v1623
      %v1625 = vmul.f32 %v1576, 1.442695
      %v1626 = vpow.pop %v1625
      %v1627 = vmul.f32 %v1577, 1.442695
      %v1628 = vpow.pop %v1627
      %v1629 = vmul.f32 %v1578, 1.442695
      %v1630 = vpow.pop %v1629
      %v1631 = vmul.f32 %v1579, 1.442695
      %v1632 = vpow.pop %v1631
      %v1633 = vmul.f32 %v1580, 1.442695
      %v1634 = vpow.pop %v1633
      %v1635 = vmul.f32 %v1581, 1.442695
      %v1636 = vpow.pop %v1635
      %v1637 = vmul.f32 %v1582, 1.442695
      %v1638 = vpow.pop %v1637
      %v1639 = vmul.f32 %v1583, 1.442695
      %v1640 = vpow.pop %v1639
      %v1641 = vmul.f32 %v1584, 1.442695
      %v1642 = vpow.pop %v1641
      %v1643 = vmul.f32 %v1585, 1.442695
      %v1644 = vpow.pop %v1643
      %v1645 = vmul.f32 %v1586, 1.442695
      %v1646 = vpow.pop %v1645
      %v1647 = vmul.f32 %v1587, 1.442695
      %v1648 = vpow.pop %v1647
      %v1649 = vmul.f32 %v1588, 1.442695
      %v1650 = vpow.pop %v1649
      %v1651 = vmul.f32 %v1589, 1.442695
      %v1652 = vpow.pop %v1651
      %v1653 = vmul.f32 %v1590, 1.442695
      %v1654 = vpow.pop %v1653
      %1655 = vadd.xlane.f32.xlu0 %v1592
      %v1656 = vpop.xlane.xlu0 %1655
      %1657 = vadd.xlane.f32.xlu0 %v1594
      %v1658 = vpop.xlane.xlu0 %1657
      %1659 = vadd.xlane.f32.xlu0 %v1596
      %v1660 = vpop.xlane.xlu0 %1659
      %1661 = vadd.xlane.f32.xlu0 %v1598
      %v1662 = vpop.xlane.xlu0 %1661
      %1663 = vadd.xlane.f32.xlu0 %v1600
      %v1664 = vpop.xlane.xlu0 %1663
      %1665 = vadd.xlane.f32.xlu0 %v1602
      %v1666 = vpop.xlane.xlu0 %1665
      %1667 = vadd.xlane.f32.xlu0 %v1604
      %v1668 = vpop.xlane.xlu0 %1667
      %1669 = vadd.xlane.f32.xlu0 %v1606
      %v1670 = vpop.xlane.xlu0 %1669
      %1671 = vadd.xlane.f32.xlu0 %v1608
      %v1672 = vpop.xlane.xlu0 %1671
      %1673 = vadd.xlane.f32.xlu0 %v1610
      %v1674 = vpop.xlane.xlu0 %1673
      %1675 = vadd.xlane.f32.xlu0 %v1612
      %v1676 = vpop.xlane.xlu0 %1675
      %1677 = vadd.xlane.f32.xlu0 %v1614
      %v1678 = vpop.xlane.xlu0 %1677
      %1679 = vadd.xlane.f32.xlu0 %v1616
      %v1680 = vpop.xlane.xlu0 %1679
      %1681 = vadd.xlane.f32.xlu0 %v1618
      %v1682 = vpop.xlane.xlu0 %1681
      %1683 = vadd.xlane.f32.xlu0 %v1620
      %v1684 = vpop.xlane.xlu0 %1683
      %1685 = vadd.xlane.f32.xlu0 %v1622
      %v1686 = vpop.xlane.xlu0 %1685
      %1687 = vadd.xlane.f32.xlu0 %v1624
      %v1688 = vpop.xlane.xlu0 %1687
      %1689 = vadd.xlane.f32.xlu0 %v1626
      %v1690 = vpop.xlane.xlu0 %1689
      %1691 = vadd.xlane.f32.xlu0 %v1628
      %v1692 = vpop.xlane.xlu0 %1691
      %1693 = vadd.xlane.f32.xlu0 %v1630
      %v1694 = vpop.xlane.xlu0 %1693
      %1695 = vadd.xlane.f32.xlu0 %v1632
      %v1696 = vpop.xlane.xlu0 %1695
      %1697 = vadd.xlane.f32.xlu0 %v1634
      %v1698 = vpop.xlane.xlu0 %1697
      %1699 = vadd.xlane.f32.xlu0 %v1636
      %v1700 = vpop.xlane.xlu0 %1699
      %1701 = vadd.xlane.f32.xlu0 %v1638
      %v1702 = vpop.xlane.xlu0 %1701
      %1703 = vadd.xlane.f32.xlu0 %v1640
      %v1704 = vpop.xlane.xlu0 %1703
      %1705 = vadd.xlane.f32.xlu0 %v1642
      %v1706 = vpop.xlane.xlu0 %1705
      %1707 = vadd.xlane.f32.xlu0 %v1644
      %v1708 = vpop.xlane.xlu0 %1707
      %1709 = vadd.xlane.f32.xlu0 %v1646
      %v1710 = vpop.xlane.xlu0 %1709
      %1711 = vadd.xlane.f32.xlu0 %v1648
      %v1712 = vpop.xlane.xlu0 %1711
      %1713 = vadd.xlane.f32.xlu0 %v1650
      %v1714 = vpop.xlane.xlu0 %1713
      %1715 = vadd.xlane.f32.xlu0 %v1652
      %v1716 = vpop.xlane.xlu0 %1715
      %1717 = vadd.xlane.f32.xlu0 %v1654
      %v1718 = vpop.xlane.xlu0 %1717
      %v1719 = vrcp.pop %v1656
      %v1720 = vmul.f32 %v1592, %v1719
      %v1721 = vrcp.pop %v1658
      %v1722 = vmul.f32 %v1594, %v1721
      %v1723 = vrcp.pop %v1660
      %v1724 = vmul.f32 %v1596, %v1723
      %v1725 = vrcp.pop %v1662
      %v1726 = vmul.f32 %v1598, %v1725
      %v1727 = vrcp.pop %v1664
      %v1728 = vmul.f32 %v1600, %v1727
      %v1729 = vrcp.pop %v1666
      %v1730 = vmul.f32 %v1602, %v1729
      %v1731 = vrcp.pop %v1668
      %v1732 = vmul.f32 %v1604, %v1731
      %v1733 = vrcp.pop %v1670
      %v1734 = vmul.f32 %v1606, %v1733
      %v1735 = vrcp.pop %v1672
      %v1736 = vmul.f32 %v1608, %v1735
      %v1737 = vrcp.pop %v1674
      %v1738 = vmul.f32 %v1610, %v1737
      %v1739 = vrcp.pop %v1676
      %v1740 = vmul.f32 %v1612, %v1739
      %v1741 = vrcp.pop %v1678
      %v1742 = vmul.f32 %v1614, %v1741
      %v1743 = vrcp.pop %v1680
      %v1744 = vmul.f32 %v1616, %v1743
      %v1745 = vrcp.pop %v1682
      %v1746 = vmul.f32 %v1618, %v1745
      %v1747 = vrcp.pop %v1684
      %v1748 = vmul.f32 %v1620, %v1747
      %v1749 = vrcp.pop %v1686
      %v1750 = vmul.f32 %v1622, %v1749
      %v1751 = vrcp.pop %v1688
      %v1752 = vmul.f32 %v1624, %v1751
      %v1753 = vrcp.pop %v1690
      %v1754 = vmul.f32 %v1626, %v1753
      %v1755 = vrcp.pop %v1692
      %v1756 = vmul.f32 %v1628, %v1755
      %v1757 = vrcp.pop %v1694
      %v1758 = vmul.f32 %v1630, %v1757
      %v1759 = vrcp.pop %v1696
      %v1760 = vmul.f32 %v1632, %v1759
      %v1761 = vrcp.pop %v1698
      %v1762 = vmul.f32 %v1634, %v1761
      %v1763 = vrcp.pop %v1700
      %v1764 = vmul.f32 %v1636, %v1763
      %v1765 = vrcp.pop %v1702
      %v1766 = vmul.f32 %v1638, %v1765
      %v1767 = vrcp.pop %v1704
      %v1768 = vmul.f32 %v1640, %v1767
      %v1769 = vrcp.pop %v1706
      %v1770 = vmul.f32 %v1642, %v1769
      %v1771 = vrcp.pop %v1708
      %v1772 = vmul.f32 %v1644, %v1771
      %v1773 = vrcp.pop %v1710
      %v1774 = vmul.f32 %v1646, %v1773
      %v1775 = vrcp.pop %v1712
      %v1776 = vmul.f32 %v1648, %v1775
      %v1777 = vrcp.pop %v1714
      %v1778 = vmul.f32 %v1650, %v1777
      %v1779 = vrcp.pop %v1716
      %v1780 = vmul.f32 %v1652, %v1779
      %v1781 = vrcp.pop %v1718
      %v1782 = vmul.f32 %v1654, %v1781
      %v1783 = vpack.c.bf16 %v1722, %v1720
      %v1784 = vpack.c.bf16 %v1726, %v1724
      %v1785 = vpack.c.bf16 %v1730, %v1728
      %v1786 = vpack.c.bf16 %v1734, %v1732
      %v1787 = vpack.c.bf16 %v1738, %v1736
      %v1788 = vpack.c.bf16 %v1742, %v1740
      %v1789 = vpack.c.bf16 %v1746, %v1744
      %v1790 = vpack.c.bf16 %v1750, %v1748
      %v1791 = vpack.c.bf16 %v1754, %v1752
      %v1792 = vpack.c.bf16 %v1758, %v1756
      %v1793 = vpack.c.bf16 %v1762, %v1760
      %v1794 = vpack.c.bf16 %v1766, %v1764
      %v1795 = vpack.c.bf16 %v1770, %v1768
      %v1796 = vpack.c.bf16 %v1774, %v1772
      %v1797 = vpack.c.bf16 %v1778, %v1776
      %v1798 = vpack.c.bf16 %v1782, %v1780
      %1799 = vmatprep.subr.bf16.mxu0 0
      %1800 = vmatpush1.bf16.xpose.msra.mxu0 %v1790
      %1801 = vmatprep.subr.bf16.mxu0 0
      %1802 = vmatpush1.bf16.xpose.msra.mxu0 %v1789
      %1803 = vmatprep.subr.bf16.mxu0 0
      %1804 = vmatpush1.bf16.xpose.msra.mxu0 %v1788
      %1805 = vmatprep.subr.bf16.mxu0 0
      %1806 = vmatpush1.bf16.xpose.msra.mxu0 %v1787
      %1807 = vmatprep.subr.bf16.mxu0 0
      %1808 = vmatpush1.bf16.xpose.msra.mxu0 %v1786
      %1809 = vmatprep.subr.bf16.mxu0 0
      %1810 = vmatpush1.bf16.xpose.msra.mxu0 %v1785
      %1811 = vmatprep.subr.bf16.mxu0 0
      %1812 = vmatpush1.bf16.xpose.msra.mxu0 %v1784
      %1813 = vmatprep.subr.bf16.mxu0 0
      %1814 = vmatpush1.bf16.xpose.msra.mxu0 %v1783
      %1815 = vmatprep.subr.bf16.mxu0 0
      %1816 = vmatpush2.bf16.xpose.msra.mxu0 %v1798
      %1817 = vmatprep.subr.bf16.mxu0 0
      %1818 = vmatpush2.bf16.xpose.msra.mxu0 %v1797
      %1819 = vmatprep.subr.bf16.mxu0 0
      %1820 = vmatpush2.bf16.xpose.msra.mxu0 %v1796
      %1821 = vmatprep.subr.bf16.mxu0 0
      %1822 = vmatpush2.bf16.xpose.msra.mxu0 %v1795
      %1823 = vmatprep.subr.bf16.mxu0 0
      %1824 = vmatpush2.bf16.xpose.msra.mxu0 %v1794
      %1825 = vmatprep.subr.bf16.mxu0 0
      %1826 = vmatpush2.bf16.xpose.msra.mxu0 %v1793
      %1827 = vmatprep.subr.bf16.mxu0 0
      %1828 = vmatpush2.bf16.xpose.msra.mxu0 %v1792
      %1829 = vmatprep.subr.bf16.mxu0 0
      %1830 = vmatpush2.bf16.xpose.msra.mxu0 %v1791
      %1831 = vmatprep.mubr.bf16.mxu0 0
      %1832 = vmatmul.mubr.bf16.gmra.mxu0 %v1248
      %v1833 = vpop.f32.mrf.mxu0
      %v1834 = vadd.f32 0.0, %v1833
      %v1835 = vpop.f32.mrf.mxu0
      %v1836 = vadd.f32 0.0, %v1835
      %v1837 = vpop.f32.mrf.mxu0
      %v1838 = vpop.f32.mrf.mxu0
      %1839 = vdwg.mxu0
      %v1840 = vld [vmem:[%s5] sm:$0xf]
      %v1841 = vld [vmem:[%s5 + $0x4] sm:$0xf]
      %v1842 = vpack.c.bf16 %v1201, %v1201
      %v1843 = vpack.c.bf16 %v1203, %v1203
      %v1844 = vpack.c.bf16 %v1834, %v1834
      %v1845 = vpack.c.bf16 %v1836, %v1836
      %v1848 = vunpack.c.l.b16 %v1840
      %v1849 = vunpack.c.l.b16 %v1841
      %v1850 = vpack.c.b16 %v1849, %v1848
      %v1852 = vsel %vm648, %v1850, 0
      %v1855 = vsel %vm697, %v1842, 0
      %v1858 = vsel %vm697, %v1843, 0
      %v1861 = vsel %vm697, %v1844, 0
      %v1864 = vsel %vm697, %v1845, 0
      %1866 = vmatprep.subr.bf16.mxu0 0
      %1867 = vmatpush1.bf16.msra.mxu0 0
      %1868 = vmatprep.subr.bf16.mxu0 0
      %1869 = vmatpush1.bf16.msra.mxu0 0
      %1870 = vmatprep.subr.bf16.mxu0 0
      %1871 = vmatpush1.bf16.msra.mxu0 0
      %1872 = vmatprep.subr.bf16.mxu0 0
      %1873 = vmatpush1.bf16.msra.mxu0 0
      %1874 = vmatprep.subr.bf16.mxu0 0
      %1875 = vmatpush1.bf16.msra.mxu0 0
      %1876 = vmatprep.subr.bf16.mxu0 0
      %1877 = vmatpush1.bf16.msra.mxu0 0
      %1878 = vmatprep.subr.bf16.mxu0 0
      %1879 = vmatpush1.bf16.msra.mxu0 0
      %1880 = vmatprep.subr.bf16.mxu0 %v1858
      %1881 = vmatpush1.bf16.msra.mxu0 %v1855
      %1882 = vmatprep.subr.bf16.mxu0 0
      %1883 = vmatpush2.bf16.msra.mxu0 0
      %1884 = vmatprep.subr.bf16.mxu0 0
      %1885 = vmatpush2.bf16.msra.mxu0 0
      %1886 = vmatprep.subr.bf16.mxu0 0
      %1887 = vmatpush2.bf16.msra.mxu0 0
      %1888 = vmatprep.subr.bf16.mxu0 0
      %1889 = vmatpush2.bf16.msra.mxu0 0
      %1890 = vmatprep.subr.bf16.mxu0 0
      %1891 = vmatpush2.bf16.msra.mxu0 0
      %1892 = vmatprep.subr.bf16.mxu0 0
      %1893 = vmatpush2.bf16.msra.mxu0 0
      %1894 = vmatprep.subr.bf16.mxu0 0
      %1895 = vmatpush2.bf16.msra.mxu0 0
      %1896 = vmatprep.subr.bf16.mxu0 0
      %1897 = vmatpush2.bf16.msra.mxu0 0
      %1898 = vmatprep.mubr.bf16.mxu0 0
      %1899 = vmatmul.mubr.bf16.gmra.mxu0 %v1852
      %v1900 = vpop.f32.mrf.mxu0
      %v1901 = vadd.f32 %v315, %v1900
      %v1902 = vpop.f32.mrf.mxu0
      %v1903 = vadd.f32 %v316, %v1902
      %v1904 = vpop.f32.mrf.mxu0
      %v1905 = vadd.f32 %v317, %v1904
      %v1906 = vpop.f32.mrf.mxu0
      %v1907 = vadd.f32 %v318, %v1906
      %1908 = vdwg.mxu0
      %1909 = vmatprep.subr.bf16.mxu0 0
      %1910 = vmatpush1.bf16.msra.mxu0 0
      %1911 = vmatprep.subr.bf16.mxu0 0
      %1912 = vmatpush1.bf16.msra.mxu0 0
      %1913 = vmatprep.subr.bf16.mxu0 0
      %1914 = vmatpush1.bf16.msra.mxu0 0
      %1915 = vmatprep.subr.bf16.mxu0 0
      %1916 = vmatpush1.bf16.msra.mxu0 0
      %1917 = vmatprep.subr.bf16.mxu0 0
      %1918 = vmatpush1.bf16.msra.mxu0 0
      %1919 = vmatprep.subr.bf16.mxu0 0
      %1920 = vmatpush1.bf16.msra.mxu0 0
      %1921 = vmatprep.subr.bf16.mxu0 0
      %1922 = vmatpush1.bf16.msra.mxu0 0
      %1923 = vmatprep.subr.bf16.mxu0 %v1864
      %1924 = vmatpush1.bf16.msra.mxu0 %v1861
      %1925 = vmatprep.subr.bf16.mxu0 0
      %1926 = vmatpush2.bf16.msra.mxu0 0
      %1927 = vmatprep.subr.bf16.mxu0 0
      %1928 = vmatpush2.bf16.msra.mxu0 0
      %1929 = vmatprep.subr.bf16.mxu0 0
      %1930 = vmatpush2.bf16.msra.mxu0 0
      %1931 = vmatprep.subr.bf16.mxu0 0
      %1932 = vmatpush2.bf16.msra.mxu0 0
      %1933 = vmatprep.subr.bf16.mxu0 0
      %1934 = vmatpush2.bf16.msra.mxu0 0
      %1935 = vmatprep.subr.bf16.mxu0 0
      %1936 = vmatpush2.bf16.msra.mxu0 0
      %1937 = vmatprep.subr.bf16.mxu0 0
      %1938 = vmatpush2.bf16.msra.mxu0 0
      %1939 = vmatprep.subr.bf16.mxu0 0
      %1940 = vmatpush2.bf16.msra.mxu0 0
      %1941 = vmatprep.mubr.bf16.mxu0 0
      %1942 = vmatmul.mubr.bf16.gmra.mxu0 %v1852
      %v1943 = vpop.f32.mrf.mxu0
      %v1944 = vadd.f32 %v320, %v1943
      %v1945 = vpop.f32.mrf.mxu0
      %v1946 = vadd.f32 %v321, %v1945
      %v1947 = vpop.f32.mrf.mxu0
      %v1948 = vadd.f32 %v322, %v1947
      %v1949 = vpop.f32.mrf.mxu0
      %v1950 = vadd.f32 %v323, %v1949
      %1951 = vdwg.mxu0
      %v1952 = vld [vmem:[%s6] sm:$0xf]
      %v1953 = vld [vmem:[%s6 + $0x4] sm:$0xf]
      %v1954 = vpack.c.bf16 %v1905, %v1901
      %v1955 = vpack.c.bf16 %v1907, %v1903
      %v1956 = vpack.c.bf16 %v1948, %v1944
      %v1957 = vpack.c.bf16 %v1950, %v1946
      %v1958 = vld [vmem:[%s7] sm:$0xff]
      %v1959 = vld [vmem:[%s7 + $0x8] sm:$0xff]
      %1961 = vset.pattern.permute.xlu0 0
      %1962 = vperm.xlu0 %1961, %v1958
      %v1963 = vpop.permute.xlu0 %1962
      %1966 = vset.pattern.permute.xlu0 0
      %1967 = vperm.xlu0 %1966, %v1959
      %v1968 = vpop.permute.xlu0 %1967
      %v1972 = vunpack.c.l.b16 %v1952
      %v1973 = vunpack.c.l.b16 %v1953
      %v1974 = vpack.c.b16 %v1973, %v1972
      %v1976 = vsel %vm335, %v1974, 0
      %1978 = vmatprep.subr.bf16.mxu0 0
      %1979 = vmatpush1.bf16.msra.mxu0 0
      %1980 = vmatprep.subr.bf16.mxu0 0
      %1981 = vmatpush1.bf16.msra.mxu0 0
      %1982 = vmatprep.subr.bf16.mxu0 0
      %1983 = vmatpush1.bf16.msra.mxu0 0
      %1984 = vmatprep.subr.bf16.mxu0 0
      %1985 = vmatpush1.bf16.msra.mxu0 0
      %1986 = vmatprep.subr.bf16.mxu0 0
      %1987 = vmatpush1.bf16.msra.mxu0 0
      %1988 = vmatprep.subr.bf16.mxu0 0
      %1989 = vmatpush1.bf16.msra.mxu0 0
      %1990 = vmatprep.subr.bf16.mxu0 0
      %1991 = vmatpush1.bf16.msra.mxu0 0
      %1992 = vmatprep.subr.bf16.mxu0 %v1955
      %1993 = vmatpush1.bf16.msra.mxu0 %v1954
      %1994 = vmatprep.subr.bf16.mxu0 0
      %1995 = vmatpush2.bf16.msra.mxu0 0
      %1996 = vmatprep.subr.bf16.mxu0 0
      %1997 = vmatpush2.bf16.msra.mxu0 0
      %1998 = vmatprep.subr.bf16.mxu0 0
      %1999 = vmatpush2.bf16.msra.mxu0 0
      %2000 = vmatprep.subr.bf16.mxu0 0
      %2001 = vmatpush2.bf16.msra.mxu0 0
      %2002 = vmatprep.subr.bf16.mxu0 0
      %2003 = vmatpush2.bf16.msra.mxu0 0
      %2004 = vmatprep.subr.bf16.mxu0 0
      %2005 = vmatpush2.bf16.msra.mxu0 0
      %2006 = vmatprep.subr.bf16.mxu0 0
      %2007 = vmatpush2.bf16.msra.mxu0 0
      %2008 = vmatprep.subr.bf16.mxu0 0
      %2009 = vmatpush2.bf16.msra.mxu0 0
      %2010 = vmatprep.mubr.bf16.mxu0 0
      %2011 = vmatmul.mubr.bf16.gmra.mxu0 %v1976
      %v2012 = vpop.f32.mrf.mxu0
      %v2013 = vadd.f32 %v1963, %v2012
      %v2014 = vpop.f32.mrf.mxu0
      %v2015 = vadd.f32 %v1963, %v2014
      %v2016 = vpop.f32.mrf.mxu0
      %v2017 = vadd.f32 %v1968, %v2016
      %v2018 = vpop.f32.mrf.mxu0
      %v2019 = vadd.f32 %v1968, %v2018
      %2020 = vdwg.mxu0
      %2021 = vmatprep.subr.bf16.mxu0 0
      %2022 = vmatpush1.bf16.msra.mxu0 0
      %2023 = vmatprep.subr.bf16.mxu0 0
      %2024 = vmatpush1.bf16.msra.mxu0 0
      %2025 = vmatprep.subr.bf16.mxu0 0
      %2026 = vmatpush1.bf16.msra.mxu0 0
      %2027 = vmatprep.subr.bf16.mxu0 0
      %2028 = vmatpush1.bf16.msra.mxu0 0
      %2029 = vmatprep.subr.bf16.mxu0 0
      %2030 = vmatpush1.bf16.msra.mxu0 0
      %2031 = vmatprep.subr.bf16.mxu0 0
      %2032 = vmatpush1.bf16.msra.mxu0 0
      %2033 = vmatprep.subr.bf16.mxu0 0
      %2034 = vmatpush1.bf16.msra.mxu0 0
      %2035 = vmatprep.subr.bf16.mxu0 %v1957
      %2036 = vmatpush1.bf16.msra.mxu0 %v1956
      %2037 = vmatprep.subr.bf16.mxu0 0
      %2038 = vmatpush2.bf16.msra.mxu0 0
      %2039 = vmatprep.subr.bf16.mxu0 0
      %2040 = vmatpush2.bf16.msra.mxu0 0
      %2041 = vmatprep.subr.bf16.mxu0 0
      %2042 = vmatpush2.bf16.msra.mxu0 0
      %2043 = vmatprep.subr.bf16.mxu0 0
      %2044 = vmatpush2.bf16.msra.mxu0 0
      %2045 = vmatprep.subr.bf16.mxu0 0
      %2046 = vmatpush2.bf16.msra.mxu0 0
      %2047 = vmatprep.subr.bf16.mxu0 0
      %2048 = vmatpush2.bf16.msra.mxu0 0
      %2049 = vmatprep.subr.bf16.mxu0 0
      %2050 = vmatpush2.bf16.msra.mxu0 0
      %2051 = vmatprep.subr.bf16.mxu0 0
      %2052 = vmatpush2.bf16.msra.mxu0 0
      %2053 = vmatprep.mubr.bf16.mxu0 0
      %2054 = vmatmul.mubr.bf16.gmra.mxu0 %v1976
      %v2055 = vpop.f32.mrf.mxu0
      %v2056 = vadd.f32 %v1963, %v2055
      %v2057 = vpop.f32.mrf.mxu0
      %v2058 = vadd.f32 %v1963, %v2057
      %v2059 = vpop.f32.mrf.mxu0
      %v2060 = vadd.f32 %v1968, %v2059
      %v2061 = vpop.f32.mrf.mxu0
      %v2062 = vadd.f32 %v1968, %v2061
      %2063 = vdwg.mxu0
      %v2064 = vmax.f32 %v2013, 0.0
      %v2065 = vmax.f32 %v2015, 0.0
      %v2066 = vmax.f32 %v2056, 0.0
      %v2067 = vmax.f32 %v2058, 0.0
      %v2068 = vmax.f32 %v2017, 0.0
      %v2069 = vmax.f32 %v2019, 0.0
      %v2070 = vmax.f32 %v2060, 0.0
      %v2071 = vmax.f32 %v2062, 0.0
      %2072 = vst [vmem:[%s312] sm:$0xff] %v2064
      %2073 = vst [vmem:[%s312 + $0x8] sm:$0xff] %v2065
      %2074 = vst [vmem:[%s312 + $0x10] sm:$0xff] %v2068
      %2075 = vst [vmem:[%s312 + $0x18] sm:$0xff] %v2069
      %s2076 = scalar_lea.vmem %s312, 32
      %2077 = vst [vmem:[%s2076] sm:$0xff] %v2066
      %2078 = vst [vmem:[%s2076 + $0x8] sm:$0xff] %v2067
      %2079 = vst [vmem:[%s2076 + $0x10] sm:$0xff] %v2070
      %2080 = vst [vmem:[%s2076 + $0x18] sm:$0xff] %v2071
      %s2081 = smul.u32 2, %s19
      %p2082 = scmp.lt.s32.totalorder %s2081, 3
      %s2083 = scalar_select %p2082, %s2081, 3
      %s2084 = smul.addr %s2083, 4
      %s2085 = smul.addr %s2084, 8
      %s2086 = scalar_lea.vmem %s8, %s2085
      // Predicated region
      $region53: #{avg_non_local.1} parent=51 // pred_check
        %p2087 = pneg %p210
      $region54: #{avg_non_local.1} parent=51 // pred_check_branch
        %2089 = sbr.rel (%p2087) target = $region56
      $region55: #{avg_non_local.1} parent=51 // pred_region
        %s2090 = smul.u32 2, %s19
      $region56: #{avg_non_local.1} parent=51 // pred_fallthru
        _
    $region52: #{avg_non_local.1} parent=5 // pred_fallthru
      _
    %p2091 = scmp.le.s32.totalorder 2, %s14
    // Predicated region
    $region57: #{avg_non_local.1} parent=5 // pred_check
      %p2092 = pneg %p2091
    $region58: #{avg_non_local.1} parent=5 // pred_check_branch
      %2094 = sbr.rel (%p2092) target = $region60
    $region59: #{avg_non_local.1} parent=5 // pred_region
      %s2095 = ssub.s32 %s14, 2
      // Predicated region
      $region61: #{avg_non_local.1} parent=59 // pred_check
        %p2096 = pneg %p216
      $region62: #{avg_non_local.1} parent=59 // pred_check_branch
        %2098 = sbr.rel (%p2096) target = $region64
      $region63: #{avg_non_local.1} parent=59 // pred_region
        %s2099 = smul.u32 2, %s20
        %p2100 = scmp.lt.s32.totalorder %s2099, 3
        %s2101 = scalar_select %p2100, %s2099, 3
        %s2102 = smul.addr %s2101, 4
        %s2103 = smul.addr %s2102, 8
        %s2104 = scalar_lea.vmem %s8, %s2103
      $region64: #{avg_non_local.1} parent=59 // pred_fallthru
        _
    $region60: #{avg_non_local.1} parent=5 // pred_fallthru
      _
  $region6: #{avg_non_local.1} parent=0 // loop_footer
    %s18 = sadd.s32 1, %s14
  $region7: #{avg_non_local.1} parent=0 // loop_footer_branch
    %13 = sbr.rel target = $region3
  $region8: #{avg_non_local.1} parent=0 // loop_exit
    _

</llo_original>
